<compile_context>
chip_gen: v7x
topology: tpu7x:2x2x1
jax: 0.10.0
libtpu: 0.0.40
codegen_flags: <defaults>
</compile_context>

<pallas_src>
import functools

import jax
import jax.numpy as jnp
from jax.experimental import pallas as pl
from jax.experimental.pallas import tpu as pltpu


def _round_up(x, m):
    return (x + m - 1) // m * m


# ----------------------------- fused kernel ----------------------------------

def _classifier_head_kernel(p1_ref, w1_ref, b1_ref, w2_ref, b2_ref, wl_ref, bl_ref,
                            o_ref, act_ref, *, nb, ho1, wo1, ho2, wo2):
    """Fully fused MSDNet classifier head for `nb` samples (one grid step).

    p1_ref : (nb*ho1*wo1, k1p)        stage-1 im2col patches (bf16, built in wrapper)
    w1_ref : (k1p, c1) bf16           conv1 taps, BN1 scale folded, K zero-padded
    b1_ref : (1, c1) f32              folded BN1 shift
    w2_ref : (9*c1, c2) bf16          conv2 taps, BN2 scale folded
    b2_ref : (1, c2) f32              folded BN2 shift
    wl_ref : (c2, ncls_pad) bf16      Linear weight (transposed, classes lane-padded)
    bl_ref : (1, ncls_pad) f32        Linear bias (lane-padded)
    o_ref  : (1, nb, ncls_pad) f32    logits
    act_ref: (nb, ho1+2, wo1+2, c1) f32  VMEM scratch: padded stage-1 activation
    """
    c1 = w1_ref.shape[-1]

    # ---- Stage 1: conv1 (pre-built im2col) + folded BN + ReLU.  M = nb*ho1*wo1. ----
    a1 = jnp.dot(p1_ref[...], w1_ref[...], preferred_element_type=jnp.float32)
    a1 = jnp.maximum(a1 + b1_ref[...], 0.0)                       # (nb*ho1*wo1, c1)

    # Stage-1 activation stays in VMEM: store it as a spatially padded NHWC map.
    # Re-zero every step (cheap, ~tens of KB) so the border is correct on every
    # megacore shard regardless of which core runs which grid indices.
    act_ref[...] = jnp.zeros_like(act_ref)
    act_ref[:, 1:ho1 + 1, 1:wo1 + 1, :] = a1.reshape(nb, ho1, wo1, c1)

    # ---- Stage 2: stride-2 im2col from the padded map, single K = 9*c1 matmul. ----
    taps = []
    for dy in range(3):
        for dx in range(3):
            t = act_ref[:, pl.ds(dy, ho2, 2), pl.ds(dx, wo2, 2), :]   # (nb, ho2, wo2, c1)
            taps.append(t.reshape(nb * ho2 * wo2, c1).astype(jnp.bfloat16))
    patch2 = jnp.concatenate(taps, axis=-1)                       # (nb*ho2*wo2, 9*c1)

    a2 = jnp.dot(patch2, w2_ref[...], preferred_element_type=jnp.float32)
    a2 = jnp.maximum(a2 + b2_ref[...], 0.0)                       # (nb*ho2*wo2, c2)

    # ---- Linear BEFORE the 2x2 average pool (they commute): keeps M = nb*ho2*wo2. ----
    z = jnp.dot(a2.astype(wl_ref.dtype), wl_ref[...],
                preferred_element_type=jnp.float32)               # (nb*ho2*wo2, ncls_pad)
    logits = jnp.mean(z.reshape(nb, ho2 * wo2, -1), axis=1) + bl_ref[...]
    o_ref[...] = logits.reshape(1, nb, logits.shape[-1])


# ----------------------------- wrapper ----------------------------------------

def _im2col_s2(xpad, ho, wo):
    """Stride-2 3x3 im2col of a spatially padded NHWC tensor (XLA-side layout plumbing)."""
    taps = []
    for dy in range(3):
        for dx in range(3):
            taps.append(xpad[:, dy:dy + 2 * ho:2, dx:dx + 2 * wo:2, :])
    return jnp.concatenate(taps, axis=-1)                         # (n, ho, wo, 9*c)


def _pick_nb(n, m_spatial):
    """Samples per grid step: aim for ~128 MXU rows, keep >=2 grid steps when possible
    (so both v7x TensorCores get work), and only use divisors of n."""
    target = max(1, 128 // max(1, m_spatial))
    if n >= 2:
        target = min(target, max(1, n // 2))
    nb = 1
    for d in range(1, n + 1):
        if n % d == 0 and d <= target:
            nb = d
    return nb


def classifier_module_forward(x_list, params, num_classes):
    """res = m(x[-1]); res = res.view(N, -1); out = linear(res)   (NCHW in, logits out)."""
    (w1, b1), (w2, b2), (wl, bl) = params
    x = x_list[-1]                                 # use the last feature map, like torch
    n, c, h, w = x.shape
    ho1, wo1 = h // 2, w // 2
    ho2, wo2 = ho1 // 2, wo1 // 2
    # TODO(synk): general AvgPool2d(2) for maps larger than 2x2 is not implemented; the
    #             MSDNet classifier head always reaches a 2x2 map here (pool -> 1x1).
    assert ho2 == 2 and wo2 == 2, "classifier head expects a 2x2 pre-pool map"

    c1 = w1.shape[-1]
    c2 = w2.shape[-1]
    k1p = w1.shape[0]
    ncls_pad = wl.shape[-1]

    # Boundary glue in one XLA pass: NCHW -> NHWC, spatial pad=1, stride-2 im2col,
    # zero-pad K to a 128-multiple, cast bf16.  (No Cin 16->128 channel inflation.)
    xh = jnp.transpose(x, (0, 2, 3, 1))
    xh = jnp.pad(xh, ((0, 0), (1, 1), (1, 1), (0, 0)))
    p1 = _im2col_s2(xh, ho1, wo1).reshape(n * ho1 * wo1, 9 * c)
    p1 = jnp.pad(p1, ((0, 0), (0, k1p - 9 * c))).astype(jnp.bfloat16)

    nb = _pick_nb(n, ho1 * wo1)
    grid = (n // nb,)

    kern = functools.partial(_classifier_head_kernel, nb=nb,
                             ho1=ho1, wo1=wo1, ho2=ho2, wo2=wo2)
    out = pl.pallas_call(
        kern,
        grid=grid,
        out_shape=jax.ShapeDtypeStruct((n // nb, nb, ncls_pad), jnp.float32),
        in_specs=[
            pl.BlockSpec((nb * ho1 * wo1, k1p), lambda i: (i, 0)),   # stage-1 patches
            pl.BlockSpec((k1p, c1), lambda i: (0, 0)),               # w1
            pl.BlockSpec((1, c1), lambda i: (0, 0)),                 # b1
            pl.BlockSpec((9 * c1, c2), lambda i: (0, 0)),            # w2
            pl.BlockSpec((1, c2), lambda i: (0, 0)),                 # b2
            pl.BlockSpec((c2, ncls_pad), lambda i: (0, 0)),          # wl
            pl.BlockSpec((1, ncls_pad), lambda i: (0, 0)),           # bl
        ],
        out_specs=pl.BlockSpec((1, nb, ncls_pad), lambda i: (i, 0, 0)),
        scratch_shapes=[pltpu.VMEM((nb, ho1 + 2, wo1 + 2, c1), jnp.float32)],
        compiler_params=pltpu.CompilerParams(dimension_semantics=("parallel",)),
    )(p1, w1, b1, w2, b2, wl, bl)

    return out.reshape(n, ncls_pad)[:, :num_classes]


# ----------------------------- parameters (synthetic, deterministic) ----------

def _fold_bn(gamma, beta, mean, var, eps=1e-5):
    scale = gamma / jnp.sqrt(var + eps)
    shift = beta - mean * scale
    return scale, shift


def init_convbn_s2(key, c_in, c_out, k_pad=None):
    """3x3 stride-2 ConvBasic params in kernel layout:
    w (k_pad or 9*c_in, c_out) bf16 with BN scale folded (zero rows for K padding);
    b (1, c_out) f32 BN shift."""
    ks = jax.random.split(key, 5)
    w = 0.1 * jax.random.normal(ks[0], (3, 3, c_in, c_out), jnp.float32)   # HWIO
    gamma = 1.0 + 0.1 * jax.random.normal(ks[1], (c_out,), jnp.float32)
    beta = 0.1 * jax.random.normal(ks[2], (c_out,), jnp.float32)
    mean = 0.05 * jax.random.normal(ks[3], (c_out,), jnp.float32)
    var = 1.0 + 0.1 * jnp.abs(jax.random.normal(ks[4], (c_out,), jnp.float32))
    scale, shift = _fold_bn(gamma, beta, mean, var)
    wf = (w * scale.reshape(1, 1, 1, c_out)).reshape(9 * c_in, c_out)
    if k_pad is not None and k_pad > 9 * c_in:
        wf = jnp.pad(wf, ((0, k_pad - 9 * c_in), (0, 0)))
    return wf.astype(jnp.bfloat16), shift.reshape(1, c_out).astype(jnp.float32)


def init_linear(key, c_in, n_classes, n_pad):
    """Linear params: wl (c_in, n_pad) bf16 (torch weight transposed, classes zero-padded),
    bl (1, n_pad) f32."""
    k1, k2 = jax.random.split(key)
    wl = 0.1 * jax.random.normal(k1, (c_in, n_classes), jnp.float32)
    bl = 0.1 * jax.random.normal(k2, (1, n_classes), jnp.float32)
    wl = jnp.pad(wl, ((0, 0), (0, n_pad - n_classes))).astype(jnp.bfloat16)
    bl = jnp.pad(bl, ((0, 0), (0, n_pad - n_classes)))
    return wl, bl


# ----------------------------- pure-JAX reference (same bf16 math) ------------

def _reference(x_list, params, num_classes):
    (w1, b1), (w2, b2), (wl, bl) = params
    x = x_list[-1]
    n, c, h, w = x.shape
    ho1, wo1 = h // 2, w // 2
    ho2, wo2 = ho1 // 2, wo1 // 2
    xh = jnp.transpose(x, (0, 2, 3, 1))
    xh = jnp.pad(xh, ((0, 0), (1, 1), (1, 1), (0, 0)))
    p1 = _im2col_s2(xh, ho1, wo1).reshape(n * ho1 * wo1, 9 * c)
    p1 = jnp.pad(p1, ((0, 0), (0, w1.shape[0] - 9 * c))).astype(jnp.bfloat16)
    a1 = jnp.maximum(jnp.dot(p1, w1, preferred_element_type=jnp.float32) + b1, 0.0)
    a1 = a1.reshape(n, ho1, wo1, -1)
    a1p = jnp.pad(a1, ((0, 0), (1, 1), (1, 1), (0, 0)))
    p2 = _im2col_s2(a1p, ho2, wo2).reshape(n * ho2 * wo2, 9 * a1.shape[-1])
    a2 = jnp.maximum(jnp.dot(p2.astype(jnp.bfloat16), w2,
                             preferred_element_type=jnp.float32) + b2, 0.0)
    z = jnp.dot(a2.astype(jnp.bfloat16), wl, preferred_element_type=jnp.float32)
    logits = jnp.mean(z.reshape(n, ho2 * wo2, -1), axis=1) + bl
    return logits[:, :num_classes]


# ----------------------------- demo -------------------------------------------

if __name__ == "__main__":
    key = jax.random.PRNGKey(0)
    k_x0, k_x1, k_c1, k_c2, k_l = jax.random.split(key, 5)

    N, C_IN, H, W = 2, 16, 8, 8          # x[-1]: coarsest MSDNet scale feature map
    C1 = C2 = 128                         # interChannels1/2 of the MSDNet classifier
    NUM_CLASSES = 10
    K1_PAD = _round_up(9 * C_IN, 128)     # 144 -> 256: lane-aligned contraction (not 1152)
    NCLS_PAD = _round_up(NUM_CLASSES, 128)

    # ClassifierModule receives the multi-scale feature list and only uses x[-1].
    x_list = [
        jax.random.normal(k_x0, (N, C_IN, 2 * H, 2 * W), jnp.float32),
        jax.random.normal(k_x1, (N, C_IN, H, W), jnp.float32),
    ]

    params = (
        init_convbn_s2(k_c1, C_IN, C1, k_pad=K1_PAD),
        init_convbn_s2(k_c2, C1, C2),
        init_linear(k_l, C2, NUM_CLASSES, NCLS_PAD),
    )

    out = classifier_module_forward(x_list, params, NUM_CLASSES)
    out = jax.block_until_ready(out)

    ref = jax.block_until_ready(_reference(x_list, params, NUM_CLASSES))

    assert out.shape == (N, NUM_CLASSES), out.shape
    assert bool(jnp.all(jnp.isfinite(out)))
    assert bool(jnp.allclose(out, ref, rtol=2e-2, atol=2e-2))
    print("KERNEL_OK")
</pallas_src>

<mosaic_0001>
module attributes {stable_mosaic.version = 11 : i64} {
  func.func @_classifier_head_kernel(%arg0: i32, %arg1: memref<16x256xbf16, #tpu.memory_space<vmem>>, %arg2: memref<256x128xbf16, #tpu.memory_space<vmem>>, %arg3: memref<1x128xf32, #tpu.memory_space<vmem>>, %arg4: memref<1152x128xbf16, #tpu.memory_space<vmem>>, %arg5: memref<1x128xf32, #tpu.memory_space<vmem>>, %arg6: memref<128x128xbf16, #tpu.memory_space<vmem>>, %arg7: memref<1x128xf32, #tpu.memory_space<vmem>>, %arg8: memref<1x1x128xf32, #tpu.memory_space<vmem>>, %arg9: memref<1x6x6x128xf32, #tpu.memory_space<vmem>>) attributes {dimension_semantics = [#tpu.dimension_semantics<parallel>], iteration_bounds = array<i64: 2>, scalar_prefetch = 0 : i64, scratch_operands = 1 : i64, tpu.core_type = #tpu.core_type<tc>, window_params = [{transform_indices = @transform_0, window_bounds = array<i64: 16, 256>}, {pipeline_mode = #tpu.pipeline_mode<synchronous>, transform_indices = @transform_1, window_bounds = array<i64: 256, 128>}, {pipeline_mode = #tpu.pipeline_mode<synchronous>, transform_indices = @transform_2, window_bounds = array<i64: 1, 128>}, {pipeline_mode = #tpu.pipeline_mode<synchronous>, transform_indices = @transform_3, window_bounds = array<i64: 1152, 128>}, {pipeline_mode = #tpu.pipeline_mode<synchronous>, transform_indices = @transform_4, window_bounds = array<i64: 1, 128>}, {pipeline_mode = #tpu.pipeline_mode<synchronous>, transform_indices = @transform_5, window_bounds = array<i64: 128, 128>}, {pipeline_mode = #tpu.pipeline_mode<synchronous>, transform_indices = @transform_6, window_bounds = array<i64: 1, 128>}, {transform_indices = @transform_7, window_bounds = array<i64: 1, 1, 128>}]} {
    %c0 = arith.constant 0 : index
    %c0_0 = arith.constant 0 : index
    %0 = vector.load %arg1[%c0, %c0_0] : memref<16x256xbf16, #tpu.memory_space<vmem>>, vector<16x256xbf16>
    %c0_1 = arith.constant 0 : index
    %c0_2 = arith.constant 0 : index
    %1 = vector.load %arg2[%c0_1, %c0_2] : memref<256x128xbf16, #tpu.memory_space<vmem>>, vector<256x128xbf16>
    %cst = arith.constant dense<0.000000e+00> : vector<16x128xf32>
    %2 = tpu.matmul %0, %1, %cst {dimension_numbers = #tpu.dot_dimension_numbers<[1], [0], [0], [1], [0, 0, 1, 1], [], []>} : vector<16x256xbf16>, vector<256x128xbf16>, vector<16x128xf32> -> vector<16x128xf32>
    %c0_3 = arith.constant 0 : index
    %c0_4 = arith.constant 0 : index
    %3 = vector.load %arg3[%c0_3, %c0_4] : memref<1x128xf32, #tpu.memory_space<vmem>>, vector<1x128xf32>
    %4 = vector.broadcast %3 : vector<1x128xf32> to vector<16x128xf32>
    %5 = arith.addf %2, %4 : vector<16x128xf32>
    %cst_5 = arith.constant 0.000000e+00 : f32
    %6 = vector.broadcast %cst_5 : f32 to vector<16x128xf32>
    %7 = arith.maximumf %5, %6 : vector<16x128xf32>
    %cst_6 = arith.constant 0.000000e+00 : f32
    %8 = vector.broadcast %cst_6 : f32 to vector<1x6x6x128xf32>
    %c0_7 = arith.constant 0 : index
    %c0_8 = arith.constant 0 : index
    %c0_9 = arith.constant 0 : index
    %c0_10 = arith.constant 0 : index
    %9 = vector.load %arg9[%c0_7, %c0_8, %c0_9, %c0_10] : memref<1x6x6x128xf32, #tpu.memory_space<vmem>>, vector<1x6x6x128xf32>
    tpu.vector_store %arg9[%c0_7, %c0_8, %c0_9, %c0_10], %8 {strides = array<i32>} : memref<1x6x6x128xf32, #tpu.memory_space<vmem>>, vector<1x6x6x128xf32>,
    %10 = vector.shape_cast %7 : vector<16x128xf32> to vector<1x4x4x128xf32>
    %c0_11 = arith.constant 0 : index
    %c1 = arith.constant 1 : index
    %c1_12 = arith.constant 1 : index
    %c0_13 = arith.constant 0 : index
    %11 = vector.load %arg9[%c0_11, %c1, %c1_12, %c0_13] : memref<1x6x6x128xf32, #tpu.memory_space<vmem>>, vector<1x4x4x128xf32>
    tpu.vector_store %arg9[%c0_11, %c1, %c1_12, %c0_13], %10 {strides = array<i32>} : memref<1x6x6x128xf32, #tpu.memory_space<vmem>>, vector<1x4x4x128xf32>,
    %c0_14 = arith.constant 0 : index
    %c0_15 = arith.constant 0 : index
    %c0_16 = arith.constant 0 : index
    %c0_17 = arith.constant 0 : index
    %12 = tpu.strided_load %arg9[%c0_14, %c0_15, %c0_16, %c0_17] {strides = array<i32: 1, 2, 2, 1>} : memref<1x6x6x128xf32, #tpu.memory_space<vmem>>, vector<1x2x2x128xf32>
    %13 = vector.shape_cast %12 : vector<1x2x2x128xf32> to vector<4x128xf32>
    %14 = arith.truncf %13 : vector<4x128xf32> to vector<4x128xbf16>
    %c0_18 = arith.constant 0 : index
    %c0_19 = arith.constant 0 : index
    %c1_20 = arith.constant 1 : index
    %c0_21 = arith.constant 0 : index
    %15 = tpu.strided_load %arg9[%c0_18, %c0_19, %c1_20, %c0_21] {strides = array<i32: 1, 2, 2, 1>} : memref<1x6x6x128xf32, #tpu.memory_space<vmem>>, vector<1x2x2x128xf32>
    %16 = vector.shape_cast %15 : vector<1x2x2x128xf32> to vector<4x128xf32>
    %17 = arith.truncf %16 : vector<4x128xf32> to vector<4x128xbf16>
    %c0_22 = arith.constant 0 : index
    %c0_23 = arith.constant 0 : index
    %c2 = arith.constant 2 : index
    %c0_24 = arith.constant 0 : index
    %18 = tpu.strided_load %arg9[%c0_22, %c0_23, %c2, %c0_24] {strides = array<i32: 1, 2, 2, 1>} : memref<1x6x6x128xf32, #tpu.memory_space<vmem>>, vector<1x2x2x128xf32>
    %19 = vector.shape_cast %18 : vector<1x2x2x128xf32> to vector<4x128xf32>
    %20 = arith.truncf %19 : vector<4x128xf32> to vector<4x128xbf16>
    %c0_25 = arith.constant 0 : index
    %c1_26 = arith.constant 1 : index
    %c0_27 = arith.constant 0 : index
    %c0_28 = arith.constant 0 : index
    %21 = tpu.strided_load %arg9[%c0_25, %c1_26, %c0_27, %c0_28] {strides = array<i32: 1, 2, 2, 1>} : memref<1x6x6x128xf32, #tpu.memory_space<vmem>>, vector<1x2x2x128xf32>
    %22 = vector.shape_cast %21 : vector<1x2x2x128xf32> to vector<4x128xf32>
    %23 = arith.truncf %22 : vector<4x128xf32> to vector<4x128xbf16>
    %c0_29 = arith.constant 0 : index
    %c1_30 = arith.constant 1 : index
    %c1_31 = arith.constant 1 : index
    %c0_32 = arith.constant 0 : index
    %24 = tpu.strided_load %arg9[%c0_29, %c1_30, %c1_31, %c0_32] {strides = array<i32: 1, 2, 2, 1>} : memref<1x6x6x128xf32, #tpu.memory_space<vmem>>, vector<1x2x2x128xf32>
    %25 = vector.shape_cast %24 : vector<1x2x2x128xf32> to vector<4x128xf32>
    %26 = arith.truncf %25 : vector<4x128xf32> to vector<4x128xbf16>
    %c0_33 = arith.constant 0 : index
    %c1_34 = arith.constant 1 : index
    %c2_35 = arith.constant 2 : index
    %c0_36 = arith.constant 0 : index
    %27 = tpu.strided_load %arg9[%c0_33, %c1_34, %c2_35, %c0_36] {strides = array<i32: 1, 2, 2, 1>} : memref<1x6x6x128xf32, #tpu.memory_space<vmem>>, vector<1x2x2x128xf32>
    %28 = vector.shape_cast %27 : vector<1x2x2x128xf32> to vector<4x128xf32>
    %29 = arith.truncf %28 : vector<4x128xf32> to vector<4x128xbf16>
    %c0_37 = arith.constant 0 : index
    %c2_38 = arith.constant 2 : index
    %c0_39 = arith.constant 0 : index
    %c0_40 = arith.constant 0 : index
    %30 = tpu.strided_load %arg9[%c0_37, %c2_38, %c0_39, %c0_40] {strides = array<i32: 1, 2, 2, 1>} : memref<1x6x6x128xf32, #tpu.memory_space<vmem>>, vector<1x2x2x128xf32>
    %31 = vector.shape_cast %30 : vector<1x2x2x128xf32> to vector<4x128xf32>
    %32 = arith.truncf %31 : vector<4x128xf32> to vector<4x128xbf16>
    %c0_41 = arith.constant 0 : index
    %c2_42 = arith.constant 2 : index
    %c1_43 = arith.constant 1 : index
    %c0_44 = arith.constant 0 : index
    %33 = tpu.strided_load %arg9[%c0_41, %c2_42, %c1_43, %c0_44] {strides = array<i32: 1, 2, 2, 1>} : memref<1x6x6x128xf32, #tpu.memory_space<vmem>>, vector<1x2x2x128xf32>
    %34 = vector.shape_cast %33 : vector<1x2x2x128xf32> to vector<4x128xf32>
    %35 = arith.truncf %34 : vector<4x128xf32> to vector<4x128xbf16>
    %c0_45 = arith.constant 0 : index
    %c2_46 = arith.constant 2 : index
    %c2_47 = arith.constant 2 : index
    %c0_48 = arith.constant 0 : index
    %36 = tpu.strided_load %arg9[%c0_45, %c2_46, %c2_47, %c0_48] {strides = array<i32: 1, 2, 2, 1>} : memref<1x6x6x128xf32, #tpu.memory_space<vmem>>, vector<1x2x2x128xf32>
    %37 = vector.shape_cast %36 : vector<1x2x2x128xf32> to vector<4x128xf32>
    %38 = arith.truncf %37 : vector<4x128xf32> to vector<4x128xbf16>
    %39 = tpu.concatenate %14, %17, %20, %23, %26, %29, %32, %35, %38 in 1 : vector<4x128xbf16>, vector<4x128xbf16>, vector<4x128xbf16>, vector<4x128xbf16>, vector<4x128xbf16>, vector<4x128xbf16>, vector<4x128xbf16>, vector<4x128xbf16>, vector<4x128xbf16> -> vector<4x1152xbf16>
    %c0_49 = arith.constant 0 : index
    %c0_50 = arith.constant 0 : index
    %40 = vector.load %arg4[%c0_49, %c0_50] : memref<1152x128xbf16, #tpu.memory_space<vmem>>, vector<1152x128xbf16>
    %cst_51 = arith.constant dense<0.000000e+00> : vector<4x128xf32>
    %41 = tpu.matmul %39, %40, %cst_51 {dimension_numbers = #tpu.dot_dimension_numbers<[1], [0], [0], [1], [0, 0, 1, 1], [], []>} : vector<4x1152xbf16>, vector<1152x128xbf16>, vector<4x128xf32> -> vector<4x128xf32>
    %c0_52 = arith.constant 0 : index
    %c0_53 = arith.constant 0 : index
    %42 = vector.load %arg5[%c0_52, %c0_53] : memref<1x128xf32, #tpu.memory_space<vmem>>, vector<1x128xf32>
    %43 = vector.broadcast %42 : vector<1x128xf32> to vector<4x128xf32>
    %44 = arith.addf %41, %43 : vector<4x128xf32>
    %cst_54 = arith.constant 0.000000e+00 : f32
    %45 = vector.broadcast %cst_54 : f32 to vector<4x128xf32>
    %46 = arith.maximumf %44, %45 : vector<4x128xf32>
    %47 = arith.truncf %46 : vector<4x128xf32> to vector<4x128xbf16>
    %c0_55 = arith.constant 0 : index
    %c0_56 = arith.constant 0 : index
    %48 = vector.load %arg6[%c0_55, %c0_56] : memref<128x128xbf16, #tpu.memory_space<vmem>>, vector<128x128xbf16>
    %cst_57 = arith.constant dense<0.000000e+00> : vector<4x128xf32>
    %49 = tpu.matmul %47, %48, %cst_57 {dimension_numbers = #tpu.dot_dimension_numbers<[1], [0], [0], [1], [0, 0, 1, 1], [], []>} : vector<4x128xbf16>, vector<128x128xbf16>, vector<4x128xf32> -> vector<4x128xf32>
    %50 = vector.shape_cast %49 : vector<4x128xf32> to vector<1x4x128xf32>
    %cst_58 = arith.constant dense<0.000000e+00> : vector<1x128xf32>
    %51 = vector.multi_reduction <add>, %50, %cst_58 [1] : vector<1x4x128xf32> to vector<1x128xf32>
    %cst_59 = arith.constant 4.000000e+00 : f32
    %52 = vector.broadcast %cst_59 : f32 to vector<1x128xf32>
    %53 = arith.divf %51, %52 : vector<1x128xf32>
    %c0_60 = arith.constant 0 : index
    %c0_61 = arith.constant 0 : index
    %54 = vector.load %arg7[%c0_60, %c0_61] : memref<1x128xf32, #tpu.memory_space<vmem>>, vector<1x128xf32>
    %55 = arith.addf %53, %54 : vector<1x128xf32>
    %56 = vector.shape_cast %55 : vector<1x128xf32> to vector<1x1x128xf32>
    %c0_62 = arith.constant 0 : index
    %c0_63 = arith.constant 0 : index
    %c0_64 = arith.constant 0 : index
    %57 = vector.load %arg8[%c0_62, %c0_63, %c0_64] : memref<1x1x128xf32, #tpu.memory_space<vmem>>, vector<1x1x128xf32>
    tpu.vector_store %arg8[%c0_62, %c0_63, %c0_64], %56 {strides = array<i32>} : memref<1x1x128xf32, #tpu.memory_space<vmem>>, vector<1x1x128xf32>,
    return
  }
  func.func @transform_0(%arg0: i32) -> (i32, i32) {
    %c0_i32 = arith.constant 0 : i32
    %c0_i32_0 = arith.constant 0 : i32
    return %arg0, %c0_i32 : i32, i32
  }
  func.func @transform_1(%arg0: i32) -> (i32, i32) {
    %c0_i32 = arith.constant 0 : i32
    %c0_i32_0 = arith.constant 0 : i32
    %c0_i32_1 = arith.constant 0 : i32
    return %c0_i32, %c0_i32_0 : i32, i32
  }
  func.func @transform_2(%arg0: i32) -> (i32, i32) {
    %c0_i32 = arith.constant 0 : i32
    %c0_i32_0 = arith.constant 0 : i32
    %c0_i32_1 = arith.constant 0 : i32
    return %c0_i32, %c0_i32_0 : i32, i32
  }
  func.func @transform_3(%arg0: i32) -> (i32, i32) {
    %c0_i32 = arith.constant 0 : i32
    %c0_i32_0 = arith.constant 0 : i32
    %c0_i32_1 = arith.constant 0 : i32
    return %c0_i32, %c0_i32_0 : i32, i32
  }
  func.func @transform_4(%arg0: i32) -> (i32, i32) {
    %c0_i32 = arith.constant 0 : i32
    %c0_i32_0 = arith.constant 0 : i32
    %c0_i32_1 = arith.constant 0 : i32
    return %c0_i32, %c0_i32_0 : i32, i32
  }
  func.func @transform_5(%arg0: i32) -> (i32, i32) {
    %c0_i32 = arith.constant 0 : i32
    %c0_i32_0 = arith.constant 0 : i32
    %c0_i32_1 = arith.constant 0 : i32
    return %c0_i32, %c0_i32_0 : i32, i32
  }
  func.func @transform_6(%arg0: i32) -> (i32, i32) {
    %c0_i32 = arith.constant 0 : i32
    %c0_i32_0 = arith.constant 0 : i32
    %c0_i32_1 = arith.constant 0 : i32
    return %c0_i32, %c0_i32_0 : i32, i32
  }
  func.func @transform_7(%arg0: i32) -> (i32, i32, i32) {
    %c0_i32 = arith.constant 0 : i32
    %c0_i32_0 = arith.constant 0 : i32
    %c0_i32_1 = arith.constant 0 : i32
    return %arg0, %c0_i32, %c0_i32_0 : i32, i32, i32
  }
}

</mosaic_0001>

<llo_original>
// kernel: tpu_custom_call.1
$region0: #{tpu_custom_call.1}
  #allocation0 [shape = 'u32[]', space=smem, size = 0x4, offset = 0x4, fixed_abs, tag = 'smem constant byte address 0x4 - core index']
  #allocation1 [shape = 'u32[144,128]{1,0:T(1,128)}', space=vmem, size = 0x12000, scoped, tag = 'internal scratch']
  #allocation2 [shape = 'f32[1,6,6,128]{3,2,1,0:T(8,128)}', space=vmem, size = 0x6000, scoped, tag = 'scratch operand']
  %s0 = inlined_call_operand.hbm [shape: bf16[32,256], index: 0, kind: input, shape index: {}]
  %s1 = inlined_call_operand.hbm [shape: bf16[256,128], index: 1, kind: input, shape index: {}]
  %s2 = inlined_call_operand.vmem [shape: f32[1,128], index: 2, kind: input, shape index: {}]
  %s3 = inlined_call_operand.hbm [shape: bf16[1152,128], index: 3, kind: input, shape index: {}]
  %s4 = inlined_call_operand.vmem [shape: f32[1,128], index: 4, kind: input, shape index: {}]
  %s5 = inlined_call_operand.hbm [shape: bf16[128,128], index: 5, kind: input, shape index: {}]
  %s6 = inlined_call_operand.vmem [shape: f32[1,128], index: 6, kind: input, shape index: {}]
  %s7 = inlined_call_operand.hbm [shape: f32[2,1,128], index: 7, kind: output, shape index: {}]
  %s8 = sld [smem:[#allocation0]]
  $region77: #{tpu_custom_call.1} parent=0
    _
  %s10 = ssub.s32 1, %s8
  %s11 = scalar_select 0, %s10, %s8
  $region1: #{tpu_custom_call.1} parent=0
    #allocation3 [shape = 'u8[16384]{0}', space=vmem, size = 0x4000, scoped, tag = 'input window, operand 0']
    #allocation4 [shape = 's32[2]{0}', space=sflag, size = 0x8, scoped, tag = 'scoped memory for tpu_custom_call.1']
    #allocation5 [shape = 's32[2]{0}', space=sflag, size = 0x8, scoped, tag = 'scoped memory for tpu_custom_call.1']
    #allocation6 [shape = 'u8[65536]{0}', space=vmem, size = 0x10000, scoped, tag = 'input window, operand 1, single buffered']
    #allocation7 [shape = 's32[1]{0}', space=sflag, size = 0x4, scoped, tag = 'scoped memory for tpu_custom_call.1']
    #allocation8 [shape = 'u8[294912]{0}', space=vmem, size = 0x48000, scoped, tag = 'input window, operand 3, single buffered']
    #allocation9 [shape = 'u8[32768]{0}', space=vmem, size = 0x8000, scoped, tag = 'input window, operand 5, single buffered']
    #allocation10 [shape = 's32[1]{0}', space=sflag, size = 0x4, scoped, tag = 'scoped memory for tpu_custom_call.1']
    #allocation11 [shape = 'u8[1024]{0}', space=vmem, size = 0x400, scoped, tag = 'output window, operand 0']
    %12 = vsyncpa [#allocation4], 0
    %s13 = scalar_lea.sflag [#allocation4], 1
    %14 = vsyncpa %s13, 0
    %15 = vsyncpa [#allocation7], 0
    %16 = vsyncpa [#allocation10], 0
    %17 = vsyncpa [#allocation5], 0
    %s18 = scalar_lea.sflag [#allocation5], 1
    %19 = vsyncpa %s18, 0
    loop: start=0, step=1, limit=4
    $region2: #{tpu_custom_call.1} parent=1 // loop_pre_header
      _
    $region3: #{tpu_custom_call.1} parent=1 // loop_header
      %s21 = sphi 0, %s25
      %p22 = scmp.ge.s32.totalorder %s21, 4
      %s31 = sphi 0, %s33
      %s34 = sphi 0, %s31
      %s35 = sphi 0, %s34
      %s51 = sphi 0, %s35
      %s55 = sphi 0, %s55
      %s57 = sphi 0, %s55
      %s58 = sphi 0, %s57
      %s72 = sphi 0, %s58
      %s76 = sphi 0, %s76
      %s78 = sphi 0, %s76
      %s79 = sphi 0, %s78
      %s93 = sphi 0, %s79
      %s97 = sphi 0, %s97
      %s99 = sphi 0, %s97
      %s100 = sphi 0, %s99
      %s114 = sphi 0, %s100
      %s118 = sphi 0, %s118
      %s120 = sphi 0, %s118
      %s121 = sphi 0, %s120
      %s135 = sphi 0, %s121
      %s139 = sphi 0, %s139
      %s141 = sphi 0, %s139
      %s142 = sphi 0, %s141
      %s156 = sphi 0, %s142
      %s160 = sphi 0, %s160
      %s162 = sphi 0, %s160
      %s163 = sphi 0, %s162
      %s177 = sphi 0, %s163
      %s183 = sphi 0, %s185
      %s186 = sphi 0, %s183
      %s187 = sphi 0, %s186
      %s203 = sphi 0, %s187
    $region4: #{tpu_custom_call.1} parent=1 // loop_header_branch
      %24 = sbr.rel (%p22) target = $region8
    $region5: #{tpu_custom_call.1} parent=1 // loop_body
      %s26 = ssub.s32 %s21, 1
      %s27 = ssub.s32 %s21, 2
      %s28 = sadd.s32 %s21, 1
      %s29 = ssub.s32 %s21, %s28
      %p30 = scmp.eq.s32.totalorder %s29, 0
      %s32 = sadd.s32 %s31, 1
      %s33 = scalar_select %p30, %s31, %s32
      %p36 = pneg %p30
      %p37 = scmp.eq.s32.totalorder %s21, 1
      %p38 = por %p36, %p37
      %p39 = scmp.ne.s32.totalorder %s31, %s34
      %p40 = scmp.eq.s32.totalorder %s21, 0
      %p41 = por %p39, %p40
      %p42 = scmp.ne.s32.totalorder %s31, %s34
      %p43 = scmp.eq.s32.totalorder %s26, 1
      %p44 = por %p42, %p43
      %p45 = scmp.ne.s32.totalorder %s34, %s35
      %p46 = scmp.eq.s32.totalorder %s26, 0
      %p47 = por %p45, %p46
      %p48 = scmp.ne.s32.totalorder %s34, %s35
      %p49 = scmp.eq.s32.totalorder %s27, 1
      %p50 = por %p48, %p49
      %p52 = scmp.ne.s32.totalorder %s35, %s51
      %p53 = scmp.eq.s32.totalorder %s27, 0
      %p54 = por %p52, %p53
      %s56 = sadd.s32 %s55, 1
      %p59 = scmp.eq.s32.totalorder %s21, 1
      %p60 = scmp.ne.s32.totalorder %s55, %s57
      %p61 = scmp.eq.s32.totalorder %s21, 0
      %p62 = por %p60, %p61
      %p63 = scmp.ne.s32.totalorder %s55, %s57
      %p64 = scmp.eq.s32.totalorder %s26, 1
      %p65 = por %p63, %p64
      %p66 = scmp.ne.s32.totalorder %s57, %s58
      %p67 = scmp.eq.s32.totalorder %s26, 0
      %p68 = por %p66, %p67
      %p69 = scmp.ne.s32.totalorder %s57, %s58
      %p70 = scmp.eq.s32.totalorder %s27, 1
      %p71 = por %p69, %p70
      %p73 = scmp.ne.s32.totalorder %s58, %s72
      %p74 = scmp.eq.s32.totalorder %s27, 0
      %p75 = por %p73, %p74
      %s77 = sadd.s32 %s76, 1
      %p80 = scmp.eq.s32.totalorder %s21, 1
      %p81 = scmp.ne.s32.totalorder %s76, %s78
      %p82 = scmp.eq.s32.totalorder %s21, 0
      %p83 = por %p81, %p82
      %p84 = scmp.ne.s32.totalorder %s76, %s78
      %p85 = scmp.eq.s32.totalorder %s26, 1
      %p86 = por %p84, %p85
      %p87 = scmp.ne.s32.totalorder %s78, %s79
      %p88 = scmp.eq.s32.totalorder %s26, 0
      %p89 = por %p87, %p88
      %p90 = scmp.ne.s32.totalorder %s78, %s79
      %p91 = scmp.eq.s32.totalorder %s27, 1
      %p92 = por %p90, %p91
      %p94 = scmp.ne.s32.totalorder %s79, %s93
      %p95 = scmp.eq.s32.totalorder %s27, 0
      %p96 = por %p94, %p95
      %s98 = sadd.s32 %s97, 1
      %p101 = scmp.eq.s32.totalorder %s21, 1
      %p102 = scmp.ne.s32.totalorder %s97, %s99
      %p103 = scmp.eq.s32.totalorder %s21, 0
      %p104 = por %p102, %p103
      %p105 = scmp.ne.s32.totalorder %s97, %s99
      %p106 = scmp.eq.s32.totalorder %s26, 1
      %p107 = por %p105, %p106
      %p108 = scmp.ne.s32.totalorder %s99, %s100
      %p109 = scmp.eq.s32.totalorder %s26, 0
      %p110 = por %p108, %p109
      %p111 = scmp.ne.s32.totalorder %s99, %s100
      %p112 = scmp.eq.s32.totalorder %s27, 1
      %p113 = por %p111, %p112
      %p115 = scmp.ne.s32.totalorder %s100, %s114
      %p116 = scmp.eq.s32.totalorder %s27, 0
      %p117 = por %p115, %p116
      %s119 = sadd.s32 %s118, 1
      %p122 = scmp.eq.s32.totalorder %s21, 1
      %p123 = scmp.ne.s32.totalorder %s118, %s120
      %p124 = scmp.eq.s32.totalorder %s21, 0
      %p125 = por %p123, %p124
      %p126 = scmp.ne.s32.totalorder %s118, %s120
      %p127 = scmp.eq.s32.totalorder %s26, 1
      %p128 = por %p126, %p127
      %p129 = scmp.ne.s32.totalorder %s120, %s121
      %p130 = scmp.eq.s32.totalorder %s26, 0
      %p131 = por %p129, %p130
      %p132 = scmp.ne.s32.totalorder %s120, %s121
      %p133 = scmp.eq.s32.totalorder %s27, 1
      %p134 = por %p132, %p133
      %p136 = scmp.ne.s32.totalorder %s121, %s135
      %p137 = scmp.eq.s32.totalorder %s27, 0
      %p138 = por %p136, %p137
      %s140 = sadd.s32 %s139, 1
      %p143 = scmp.eq.s32.totalorder %s21, 1
      %p144 = scmp.ne.s32.totalorder %s139, %s141
      %p145 = scmp.eq.s32.totalorder %s21, 0
      %p146 = por %p144, %p145
      %p147 = scmp.ne.s32.totalorder %s139, %s141
      %p148 = scmp.eq.s32.totalorder %s26, 1
      %p149 = por %p147, %p148
      %p150 = scmp.ne.s32.totalorder %s141, %s142
      %p151 = scmp.eq.s32.totalorder %s26, 0
      %p152 = por %p150, %p151
      %p153 = scmp.ne.s32.totalorder %s141, %s142
      %p154 = scmp.eq.s32.totalorder %s27, 1
      %p155 = por %p153, %p154
      %p157 = scmp.ne.s32.totalorder %s142, %s156
      %p158 = scmp.eq.s32.totalorder %s27, 0
      %p159 = por %p157, %p158
      %s161 = sadd.s32 %s160, 1
      %p164 = scmp.eq.s32.totalorder %s21, 1
      %p165 = scmp.ne.s32.totalorder %s160, %s162
      %p166 = scmp.eq.s32.totalorder %s21, 0
      %p167 = por %p165, %p166
      %p168 = scmp.ne.s32.totalorder %s160, %s162
      %p169 = scmp.eq.s32.totalorder %s26, 1
      %p170 = por %p168, %p169
      %p171 = scmp.ne.s32.totalorder %s162, %s163
      %p172 = scmp.eq.s32.totalorder %s26, 0
      %p173 = por %p171, %p172
      %p174 = scmp.ne.s32.totalorder %s162, %s163
      %p175 = scmp.eq.s32.totalorder %s27, 1
      %p176 = por %p174, %p175
      %p178 = scmp.ne.s32.totalorder %s163, %s177
      %p179 = scmp.eq.s32.totalorder %s27, 0
      %p180 = por %p178, %p179
      %s181 = ssub.s32 %s21, %s28
      %p182 = scmp.eq.s32.totalorder %s181, 0
      %s184 = sadd.s32 %s183, 1
      %s185 = scalar_select %p182, %s183, %s184
      %p188 = pneg %p182
      %p189 = scmp.eq.s32.totalorder %s21, 1
      %p190 = por %p188, %p189
      %p191 = scmp.ne.s32.totalorder %s183, %s186
      %p192 = scmp.eq.s32.totalorder %s21, 0
      %p193 = por %p191, %p192
      %p194 = scmp.ne.s32.totalorder %s183, %s186
      %p195 = scmp.eq.s32.totalorder %s26, 1
      %p196 = por %p194, %p195
      %p197 = scmp.ne.s32.totalorder %s186, %s187
      %p198 = scmp.eq.s32.totalorder %s26, 0
      %p199 = por %p197, %p198
      %p200 = scmp.ne.s32.totalorder %s186, %s187
      %p201 = scmp.eq.s32.totalorder %s27, 1
      %p202 = por %p200, %p201
      %p204 = scmp.ne.s32.totalorder %s187, %s203
      %p205 = scmp.eq.s32.totalorder %s27, 0
      %p206 = por %p204, %p205
      %p207 = scmp.le.s32.totalorder 1, %s21
      %p208 = scmp.lt.s32.totalorder %s21, 3
      %p209 = pnand %p207, %p208
      %p210 = pneg %p209
      // Predicated region
      $region9: #{tpu_custom_call.1} parent=5 // pred_check
        _
      $region10: #{tpu_custom_call.1} parent=5 // pred_check_branch
        %212 = sbr.rel (%p209) target = $region12
      $region11: #{tpu_custom_call.1} parent=5 // pred_region
        %s213 = ssub.s32 %s21, 1
        // Predicated region
        $region13: #{tpu_custom_call.1} parent=11 // pred_check
          %p214 = pneg %p68
        $region14: #{tpu_custom_call.1} parent=11 // pred_check_branch
          %216 = sbr.rel (%p214) target = $region16
        $region15: #{tpu_custom_call.1} parent=11 // pred_region
          %s218 = ssub.s32 2048, 2048
          %219 = vsyncadd [#allocation7], %s218
          %s220 = sshll.u32 [#allocation6], 4
          %s221 = int_to_ptr.vmem [resolvable:$true] %s220
          %226 = dma.hbm_to_vmem [thread:$0]  %s1, 2048, %s221, [#allocation7], 64, 64, 4
        $region16: #{tpu_custom_call.1} parent=11 // pred_fallthru
          _
        // Predicated region
        $region17: #{tpu_custom_call.1} parent=11 // pred_check
          %p227 = pneg %p89
        $region18: #{tpu_custom_call.1} parent=11 // pred_check_branch
          %229 = sbr.rel (%p227) target = $region20
        $region19: #{tpu_custom_call.1} parent=11 // pred_region
          _
        $region20: #{tpu_custom_call.1} parent=11 // pred_fallthru
          _
        // Predicated region
        $region21: #{tpu_custom_call.1} parent=11 // pred_check
          %p230 = pneg %p110
        $region22: #{tpu_custom_call.1} parent=11 // pred_check_branch
          %232 = sbr.rel (%p230) target = $region24
        $region23: #{tpu_custom_call.1} parent=11 // pred_region
          %s234 = ssub.s32 9216, 9216
          %235 = vsyncadd [#allocation7], %s234
          %s236 = sshll.u32 [#allocation8], 4
          %s237 = int_to_ptr.vmem [resolvable:$true] %s236
          %242 = dma.hbm_to_vmem [thread:$0]  %s3, 9216, %s237, [#allocation7], 64, 64, 4
        $region24: #{tpu_custom_call.1} parent=11 // pred_fallthru
          _
        // Predicated region
        $region25: #{tpu_custom_call.1} parent=11 // pred_check
          %p243 = pneg %p131
        $region26: #{tpu_custom_call.1} parent=11 // pred_check_branch
          %245 = sbr.rel (%p243) target = $region28
        $region27: #{tpu_custom_call.1} parent=11 // pred_region
          _
        $region28: #{tpu_custom_call.1} parent=11 // pred_fallthru
          _
        // Predicated region
        $region29: #{tpu_custom_call.1} parent=11 // pred_check
          %p246 = pneg %p152
        $region30: #{tpu_custom_call.1} parent=11 // pred_check_branch
          %248 = sbr.rel (%p246) target = $region32
        $region31: #{tpu_custom_call.1} parent=11 // pred_region
          %s250 = ssub.s32 1024, 1024
          %251 = vsyncadd [#allocation10], %s250
          %s252 = sshll.u32 [#allocation9], 4
          %s253 = int_to_ptr.vmem [resolvable:$true] %s252
          %258 = dma.hbm_to_vmem [thread:$0]  %s5, 1024, %s253, [#allocation10], 64, 64, 4
        $region32: #{tpu_custom_call.1} parent=11 // pred_fallthru
          _
        // Predicated region
        $region33: #{tpu_custom_call.1} parent=11 // pred_check
          %p259 = pneg %p173
        $region34: #{tpu_custom_call.1} parent=11 // pred_check_branch
          %261 = sbr.rel (%p259) target = $region36
        $region35: #{tpu_custom_call.1} parent=11 // pred_region
          _
        $region36: #{tpu_custom_call.1} parent=11 // pred_fallthru
          _
      $region12: #{tpu_custom_call.1} parent=5 // pred_fallthru
        _
      %p262 = scmp.lt.s32.totalorder %s21, 2
      // Predicated region
      $region37: #{tpu_custom_call.1} parent=5 // pred_check
        %p263 = pneg %p262
      $region38: #{tpu_custom_call.1} parent=5 // pred_check_branch
        %265 = sbr.rel (%p263) target = $region40
      $region39: #{tpu_custom_call.1} parent=5 // pred_region
        // Predicated region
        $region41: #{tpu_custom_call.1} parent=39 // pred_check
          %p266 = pneg %p41
        $region42: #{tpu_custom_call.1} parent=39 // pred_check_branch
          %268 = sbr.rel (%p266) target = $region44
        $region43: #{tpu_custom_call.1} parent=39 // pred_region
          %s269 = sand.u32 %s31, 1
          %s270 = scalar_lea.sflag [#allocation4], %s269
          %s271 = sand.u32 %s31, 1
          %s272 = smul.addr %s271, 16
          %s273 = scalar_lea.vmem [#allocation3], %s272
          %s274 = smul.u32 2, %s21
          %s276 = ssub.s32 256, 256
          %277 = vsyncadd %s270, %s276
          %s278 = smul.addr %s274, 2
          %s279 = smul.addr %s278, 64
          %s280 = scalar_lea.hbm %s0, %s279
          %s281 = sshll.u32 %s273, 4
          %s282 = int_to_ptr.vmem [resolvable:$true] %s281
          %287 = dma.hbm_to_vmem [thread:$0]  %s280, 256, %s282, %s270, 128, 128, 8
        $region44: #{tpu_custom_call.1} parent=39 // pred_fallthru
          _
      $region40: #{tpu_custom_call.1} parent=5 // pred_fallthru
        _
      %p288 = scmp.le.s32.totalorder 1, %s21
      %p289 = scmp.lt.s32.totalorder %s21, 3
      %p290 = pnand %p288, %p289
      %p291 = pneg %p290
      // Predicated region
      $region45: #{tpu_custom_call.1} parent=5 // pred_check
        _
      $region46: #{tpu_custom_call.1} parent=5 // pred_check_branch
        %293 = sbr.rel (%p290) target = $region48
      $region47: #{tpu_custom_call.1} parent=5 // pred_region
        %s294 = ssub.s32 %s21, 1
        %s295 = sand.u32 %s34, 1
        %s296 = scalar_lea.sflag [#allocation4], %s295
        %s297 = sand.u32 %s34, 1
        %s298 = smul.addr %s297, 16
        %s299 = scalar_lea.vmem [#allocation3], %s298
        // Predicated region
        $region49: #{tpu_custom_call.1} parent=47 // pred_check
          %p300 = pneg %p47
        $region50: #{tpu_custom_call.1} parent=47 // pred_check_branch
          %302 = sbr.rel (%p300) target = $region52
        $region51: #{tpu_custom_call.1} parent=47 // pred_region
          %303 = dma.done %s296, 256
        $region52: #{tpu_custom_call.1} parent=47 // pred_fallthru
          _
        // Predicated region
        $region53: #{tpu_custom_call.1} parent=47 // pred_check
          %p304 = pneg %p68
        $region54: #{tpu_custom_call.1} parent=47 // pred_check_branch
          %306 = sbr.rel (%p304) target = $region56
        $region55: #{tpu_custom_call.1} parent=47 // pred_region
          %307 = dma.done [#allocation7], 2048
        $region56: #{tpu_custom_call.1} parent=47 // pred_fallthru
          _
        // Predicated region
        $region57: #{tpu_custom_call.1} parent=47 // pred_check
          %p308 = pneg %p110
        $region58: #{tpu_custom_call.1} parent=47 // pred_check_branch
          %310 = sbr.rel (%p308) target = $region60
        $region59: #{tpu_custom_call.1} parent=47 // pred_region
          %311 = dma.done [#allocation7], 9216
        $region60: #{tpu_custom_call.1} parent=47 // pred_fallthru
          _
        // Predicated region
        $region61: #{tpu_custom_call.1} parent=47 // pred_check
          %p312 = pneg %p152
        $region62: #{tpu_custom_call.1} parent=47 // pred_check_branch
          %314 = sbr.rel (%p312) target = $region64
        $region63: #{tpu_custom_call.1} parent=47 // pred_region
          %315 = dma.done [#allocation10], 1024
        $region64: #{tpu_custom_call.1} parent=47 // pred_fallthru
          _
        %s316 = sand.u32 %s34, 1
        %s317 = scalar_lea.sflag [#allocation4], %s316
        %s318 = sand.u32 %s34, 1
        %s319 = smul.addr %s318, 16
        %s320 = scalar_lea.vmem [#allocation3], %s319
        %p321 = pneg %p47
        %p322 = pneg %p44
        %p323 = pneg %p68
        %p324 = pneg %p65
        %p325 = pneg %p89
        %p326 = pneg %p86
        %p327 = pneg %p110
        %p328 = pneg %p107
        %p329 = pneg %p131
        %p330 = pneg %p128
        %p331 = pneg %p152
        %p332 = pneg %p149
        %p333 = pneg %p173
        %p334 = pneg %p170
        %p335 = pneg %p199
        %p336 = pneg %p196
        %s337 = sand.u32 %s186, 1
        %s338 = scalar_lea.sflag [#allocation5], %s337
        %s339 = sand.u32 %s186, 1
        %s340 = scalar_lea.vmem [#allocation11], %s339
        %s341 = smul.u32 2, %s26
        %v343 = vld [vmem:[%s299] sm:$0xff]
        %v344 = vld [vmem:[%s299 + $0x8] sm:$0xff]
        %v345 = vld [vmem:[#allocation6] sm:$0xf]
        %v346 = vld [vmem:[#allocation6 + $0x4] sm:$0xf]
        %v347 = vld [vmem:[#allocation6 + $0x8] sm:$0xf]
        %v348 = vld [vmem:[#allocation6 + $0xc] sm:$0xf]
        %v349 = vld [vmem:[#allocation6 + $0x10] sm:$0xf]
        %v350 = vld [vmem:[#allocation6 + $0x14] sm:$0xf]
        %v351 = vld [vmem:[#allocation6 + $0x18] sm:$0xf]
        %v352 = vld [vmem:[#allocation6 + $0x1c] sm:$0xf]
        %v353 = vld [vmem:[#allocation6 + $0x20] sm:$0xf]
        %v354 = vld [vmem:[#allocation6 + $0x24] sm:$0xf]
        %v355 = vld [vmem:[#allocation6 + $0x28] sm:$0xf]
        %v356 = vld [vmem:[#allocation6 + $0x2c] sm:$0xf]
        %v357 = vld [vmem:[#allocation6 + $0x30] sm:$0xf]
        %v358 = vld [vmem:[#allocation6 + $0x34] sm:$0xf]
        %v359 = vld [vmem:[#allocation6 + $0x38] sm:$0xf]
        %v360 = vld [vmem:[#allocation6 + $0x3c] sm:$0xf]
        %v361 = vld [vmem:[#allocation6 + $0x40] sm:$0xf]
        %v362 = vld [vmem:[#allocation6 + $0x44] sm:$0xf]
        %v363 = vld [vmem:[#allocation6 + $0x48] sm:$0xf]
        %v364 = vld [vmem:[#allocation6 + $0x4c] sm:$0xf]
        %v365 = vld [vmem:[#allocation6 + $0x50] sm:$0xf]
        %v366 = vld [vmem:[#allocation6 + $0x54] sm:$0xf]
        %v367 = vld [vmem:[#allocation6 + $0x58] sm:$0xf]
        %v368 = vld [vmem:[#allocation6 + $0x5c] sm:$0xf]
        %v369 = vld [vmem:[#allocation6 + $0x60] sm:$0xf]
        %v370 = vld [vmem:[#allocation6 + $0x64] sm:$0xf]
        %v371 = vld [vmem:[#allocation6 + $0x68] sm:$0xf]
        %v372 = vld [vmem:[#allocation6 + $0x6c] sm:$0xf]
        %v373 = vld [vmem:[#allocation6 + $0x70] sm:$0xf]
        %v374 = vld [vmem:[#allocation6 + $0x74] sm:$0xf]
        %v375 = vld [vmem:[#allocation6 + $0x78] sm:$0xf]
        %v376 = vld [vmem:[#allocation6 + $0x7c] sm:$0xf]
        %v377 = vld [vmem:[%s2] sm:$0x1]
        %v379 = vlaneseq
        %v380 = vshrl.u32 %v379, 7
        %v381 = vsub.s32 0, %v380
        %v382 = vrot.slane %v377, %v381
        %v386 = vunpack.c.l.b16 %v343
        %v387 = vunpack.c.h.b16 %v343
        %v388 = vunpack.c.l.b16 %v344
        %v389 = vunpack.c.h.b16 %v344
        %v390 = vpack.c.b16 %v388, %v386
        %v391 = vpack.c.b16 %v389, %v387
        %v426 = vunpack.c.l.b16 %v345
        %v427 = vunpack.c.l.b16 %v346
        %v428 = vunpack.c.l.b16 %v347
        %v429 = vunpack.c.l.b16 %v348
        %v430 = vunpack.c.l.b16 %v349
        %v431 = vunpack.c.l.b16 %v350
        %v432 = vunpack.c.l.b16 %v351
        %v433 = vunpack.c.l.b16 %v352
        %v434 = vunpack.c.l.b16 %v353
        %v435 = vunpack.c.l.b16 %v354
        %v436 = vunpack.c.l.b16 %v355
        %v437 = vunpack.c.l.b16 %v356
        %v438 = vunpack.c.l.b16 %v357
        %v439 = vunpack.c.l.b16 %v358
        %v440 = vunpack.c.l.b16 %v359
        %v441 = vunpack.c.l.b16 %v360
        %v442 = vunpack.c.l.b16 %v361
        %v443 = vunpack.c.l.b16 %v362
        %v444 = vunpack.c.l.b16 %v363
        %v445 = vunpack.c.l.b16 %v364
        %v446 = vunpack.c.l.b16 %v365
        %v447 = vunpack.c.l.b16 %v366
        %v448 = vunpack.c.l.b16 %v367
        %v449 = vunpack.c.l.b16 %v368
        %v450 = vunpack.c.l.b16 %v369
        %v451 = vunpack.c.l.b16 %v370
        %v452 = vunpack.c.l.b16 %v371
        %v453 = vunpack.c.l.b16 %v372
        %v454 = vunpack.c.l.b16 %v373
        %v455 = vunpack.c.l.b16 %v374
        %v456 = vunpack.c.l.b16 %v375
        %v457 = vunpack.c.l.b16 %v376
        %v458 = vpack.c.b16 %v427, %v426
        %v459 = vpack.c.b16 %v429, %v428
        %v460 = vpack.c.b16 %v431, %v430
        %v461 = vpack.c.b16 %v433, %v432
        %v462 = vpack.c.b16 %v435, %v434
        %v463 = vpack.c.b16 %v437, %v436
        %v464 = vpack.c.b16 %v439, %v438
        %v465 = vpack.c.b16 %v441, %v440
        %v466 = vpack.c.b16 %v443, %v442
        %v467 = vpack.c.b16 %v445, %v444
        %v468 = vpack.c.b16 %v447, %v446
        %v469 = vpack.c.b16 %v449, %v448
        %v470 = vpack.c.b16 %v451, %v450
        %v471 = vpack.c.b16 %v453, %v452
        %v472 = vpack.c.b16 %v455, %v454
        %v473 = vpack.c.b16 %v457, %v456
        %490 = vmatprep.subr.bf16.mxu0 0
        %491 = vmatpush1.bf16.msra.mxu0 %v458
        %492 = vmatprep.subr.bf16.mxu0 0
        %493 = vmatpush1.bf16.msra.mxu0 %v459
        %494 = vmatprep.subr.bf16.mxu0 0
        %495 = vmatpush1.bf16.msra.mxu0 %v460
        %496 = vmatprep.subr.bf16.mxu0 0
        %497 = vmatpush1.bf16.msra.mxu0 %v461
        %498 = vmatprep.subr.bf16.mxu0 0
        %499 = vmatpush1.bf16.msra.mxu0 %v462
        %500 = vmatprep.subr.bf16.mxu0 0
        %501 = vmatpush1.bf16.msra.mxu0 %v463
        %502 = vmatprep.subr.bf16.mxu0 0
        %503 = vmatpush1.bf16.msra.mxu0 %v464
        %504 = vmatprep.subr.bf16.mxu0 0
        %505 = vmatpush1.bf16.msra.mxu0 %v465
        %506 = vmatprep.subr.bf16.mxu0 0
        %507 = vmatpush1.bf16.msra.mxu0 %v466
        %508 = vmatprep.subr.bf16.mxu0 0
        %509 = vmatpush1.bf16.msra.mxu0 %v467
        %510 = vmatprep.subr.bf16.mxu0 0
        %511 = vmatpush1.bf16.msra.mxu0 %v468
        %512 = vmatprep.subr.bf16.mxu0 0
        %513 = vmatpush1.bf16.msra.mxu0 %v469
        %514 = vmatprep.subr.bf16.mxu0 0
        %515 = vmatpush1.bf16.msra.mxu0 %v470
        %516 = vmatprep.subr.bf16.mxu0 0
        %517 = vmatpush1.bf16.msra.mxu0 %v471
        %518 = vmatprep.subr.bf16.mxu0 0
        %519 = vmatpush1.bf16.msra.mxu0 %v472
        %520 = vmatprep.subr.bf16.mxu0 0
        %521 = vmatpush1.bf16.msra.mxu0 %v473
        %522 = vmatprep.mubr.bf16.mxu0 %v391
        %523 = vmatmul.mubr.bf16.gmra.mrb[0].mxu0 %v390
        %v524 = vpop.f32.mrb[0].mxu0
        %v525 = vadd.f32 %v382, %v524
        %v526 = vpop.f32.mrb[0].mxu0
        %v527 = vpop.f32.mrb[0].mxu0
        %v528 = vadd.f32 %v382, %v527
        %v529 = vpop.f32.mrb[0].mxu0
        %530 = vdwg.mxu0
        %v531 = vmax.f32 %v525, 0.0
        %v532 = vmax.f32 %v528, 0.0
        %533 = vst [vmem:[#allocation2] sm:$0x3f] 0.0
        %534 = vst [vmem:[#allocation2 + $0x8] sm:$0x3f] 0.0
        %535 = vst [vmem:[#allocation2 + $0x10] sm:$0x3f] 0.0
        %536 = vst [vmem:[#allocation2 + $0x18] sm:$0x3f] 0.0
        %537 = vst [vmem:[#allocation2 + $0x20] sm:$0x3f] 0.0
        %538 = vst [vmem:[#allocation2 + $0x28] sm:$0x3f] 0.0
        %v541 = vcombine.high %v531, %v531
        %v542 = vcombine.high %v532, %v532
        %s545 = scalar_lea.vmem [#allocation2], 8
        %546 = vst [vmem:[%s545 + $0x1] sm:$0xf] %v531
        %547 = vst [vmem:[%s545 + $0x9] sm:$0xf] %v541
        %548 = vst [vmem:[%s545 + $0x11] sm:$0xf] %v532
        %549 = vst [vmem:[%s545 + $0x19] sm:$0xf] %v542
        %v550 = vld [vmem:[#allocation2] ss:$2 sm:$0x3]
        %s551 = scalar_lea.vmem [#allocation2], 16
        %v552 = vld [vmem:[%s551] ss:$2 sm:$0x3]
        %v555 = vcombine.low %v550, %v552
        %v557 = vunpack.c.l.s4 1983009808
        %v558 = vunpack.c.0.s8 %v557
        %v559 = vlaneseq
        %v560 = vshrl.u32 %v559, 7
        %v561 = vsub.s32 %v558, %v560
        %v562 = vrot.slane %v555, %v561
        %v564 = vpack.c.bf16 %v562, %v562
        %s565 = scalar_lea.vmem [#allocation2], 1
        %v566 = vld [vmem:[%s565] ss:$2 sm:$0x3]
        %s567 = scalar_lea.vmem [#allocation2], 17
        %v568 = vld [vmem:[%s567] ss:$2 sm:$0x3]
        %v571 = vcombine.low %v566, %v568
        %v573 = vunpack.c.l.s4 1983009808
        %v574 = vunpack.c.0.s8 %v573
        %v575 = vlaneseq
        %v576 = vshrl.u32 %v575, 7
        %v577 = vsub.s32 %v574, %v576
        %v578 = vrot.slane %v571, %v577
        %v580 = vpack.c.bf16 %v578, %v578
        %s581 = scalar_lea.vmem [#allocation2], 2
        %v582 = vld [vmem:[%s581] ss:$2 sm:$0x3]
        %s583 = scalar_lea.vmem [#allocation2], 18
        %v584 = vld [vmem:[%s583] ss:$2 sm:$0x3]
        %v587 = vcombine.low %v582, %v584
        %v589 = vunpack.c.l.s4 1983009808
        %v590 = vunpack.c.0.s8 %v589
        %v591 = vlaneseq
        %v592 = vshrl.u32 %v591, 7
        %v593 = vsub.s32 %v590, %v592
        %v594 = vrot.slane %v587, %v593
        %v596 = vpack.c.bf16 %v594, %v594
        %v597 = vld [vmem:[%s545] ss:$2 sm:$0x3]
        %s598 = scalar_lea.vmem %s545, 16 [#allocation2]
        %v599 = vld [vmem:[%s598] ss:$2 sm:$0x3]
        %v602 = vcombine.low %v597, %v599
        %v604 = vunpack.c.l.s4 1983009808
        %v605 = vunpack.c.0.s8 %v604
        %v606 = vlaneseq
        %v607 = vshrl.u32 %v606, 7
        %v608 = vsub.s32 %v605, %v607
        %v609 = vrot.slane %v602, %v608
        %v611 = vpack.c.bf16 %v609, %v609
        %s612 = scalar_lea.vmem %s545, 1 [#allocation2]
        %v613 = vld [vmem:[%s612] ss:$2 sm:$0x3]
        %s614 = scalar_lea.vmem %s545, 17 [#allocation2]
        %v615 = vld [vmem:[%s614] ss:$2 sm:$0x3]
        %v618 = vcombine.low %v613, %v615
        %v620 = vunpack.c.l.s4 1983009808
        %v621 = vunpack.c.0.s8 %v620
        %v622 = vlaneseq
        %v623 = vshrl.u32 %v622, 7
        %v624 = vsub.s32 %v621, %v623
        %v625 = vrot.slane %v618, %v624
        %v627 = vpack.c.bf16 %v625, %v625
        %s628 = scalar_lea.vmem %s545, 2 [#allocation2]
        %v629 = vld [vmem:[%s628] ss:$2 sm:$0x3]
        %s630 = scalar_lea.vmem %s545, 18 [#allocation2]
        %v631 = vld [vmem:[%s630] ss:$2 sm:$0x3]
        %v634 = vcombine.low %v629, %v631
        %v636 = vunpack.c.l.s4 1983009808
        %v637 = vunpack.c.0.s8 %v636
        %v638 = vlaneseq
        %v639 = vshrl.u32 %v638, 7
        %v640 = vsub.s32 %v637, %v639
        %v641 = vrot.slane %v634, %v640
        %v643 = vpack.c.bf16 %v641, %v641
        %s644 = scalar_lea.vmem [#allocation2], 16
        %v645 = vld [vmem:[%s644] ss:$2 sm:$0x3]
        %s646 = scalar_lea.vmem %s644, 16 [#allocation2]
        %v647 = vld [vmem:[%s646] ss:$2 sm:$0x3]
        %v650 = vcombine.low %v645, %v647
        %v652 = vunpack.c.l.s4 1983009808
        %v653 = vunpack.c.0.s8 %v652
        %v654 = vlaneseq
        %v655 = vshrl.u32 %v654, 7
        %v656 = vsub.s32 %v653, %v655
        %v657 = vrot.slane %v650, %v656
        %v659 = vpack.c.bf16 %v657, %v657
        %s660 = scalar_lea.vmem %s644, 1 [#allocation2]
        %v661 = vld [vmem:[%s660] ss:$2 sm:$0x3]
        %s662 = scalar_lea.vmem %s644, 17 [#allocation2]
        %v663 = vld [vmem:[%s662] ss:$2 sm:$0x3]
        %v666 = vcombine.low %v661, %v663
        %v668 = vunpack.c.l.s4 1983009808
        %v669 = vunpack.c.0.s8 %v668
        %v670 = vlaneseq
        %v671 = vshrl.u32 %v670, 7
        %v672 = vsub.s32 %v669, %v671
        %v673 = vrot.slane %v666, %v672
        %v675 = vpack.c.bf16 %v673, %v673
        %s676 = scalar_lea.vmem %s644, 2 [#allocation2]
        %v677 = vld [vmem:[%s676] ss:$2 sm:$0x3]
        %s678 = scalar_lea.vmem %s644, 18 [#allocation2]
        %v679 = vld [vmem:[%s678] ss:$2 sm:$0x3]
        %v682 = vcombine.low %v677, %v679
        %v684 = vunpack.c.l.s4 1983009808
        %v685 = vunpack.c.0.s8 %v684
        %v686 = vlaneseq
        %v687 = vshrl.u32 %v686, 7
        %v688 = vsub.s32 %v685, %v687
        %v689 = vrot.slane %v682, %v688
        %v691 = vpack.c.bf16 %v689, %v689
        %v692 = vld [vmem:[#allocation8] sm:$0xf]
        %v693 = vld [vmem:[#allocation8 + $0x4] sm:$0xf]
        %v694 = vld [vmem:[#allocation8 + $0x8] sm:$0xf]
        %v695 = vld [vmem:[#allocation8 + $0xc] sm:$0xf]
        %v696 = vld [vmem:[#allocation8 + $0x10] sm:$0xf]
        %v697 = vld [vmem:[#allocation8 + $0x14] sm:$0xf]
        %v698 = vld [vmem:[#allocation8 + $0x18] sm:$0xf]
        %v699 = vld [vmem:[#allocation8 + $0x1c] sm:$0xf]
        %v700 = vld [vmem:[#allocation8 + $0x20] sm:$0xf]
        %v701 = vld [vmem:[#allocation8 + $0x24] sm:$0xf]
        %v702 = vld [vmem:[#allocation8 + $0x28] sm:$0xf]
        %v703 = vld [vmem:[#allocation8 + $0x2c] sm:$0xf]
        %v704 = vld [vmem:[#allocation8 + $0x30] sm:$0xf]
        %v705 = vld [vmem:[#allocation8 + $0x34] sm:$0xf]
        %v706 = vld [vmem:[#allocation8 + $0x38] sm:$0xf]
        %v707 = vld [vmem:[#allocation8 + $0x3c] sm:$0xf]
        %v708 = vld [vmem:[#allocation8 + $0x40] sm:$0xf]
        %v709 = vld [vmem:[#allocation8 + $0x44] sm:$0xf]
        %v710 = vld [vmem:[#allocation8 + $0x48] sm:$0xf]
        %v711 = vld [vmem:[#allocation8 + $0x4c] sm:$0xf]
        %v712 = vld [vmem:[#allocation8 + $0x50] sm:$0xf]
        %v713 = vld [vmem:[#allocation8 + $0x54] sm:$0xf]
        %v714 = vld [vmem:[#allocation8 + $0x58] sm:$0xf]
        %v715 = vld [vmem:[#allocation8 + $0x5c] sm:$0xf]
        %v716 = vld [vmem:[#allocation8 + $0x60] sm:$0xf]
        %v717 = vld [vmem:[#allocation8 + $0x64] sm:$0xf]
        %v718 = vld [vmem:[#allocation8 + $0x68] sm:$0xf]
        %v719 = vld [vmem:[#allocation8 + $0x6c] sm:$0xf]
        %v720 = vld [vmem:[#allocation8 + $0x70] sm:$0xf]
        %v721 = vld [vmem:[#allocation8 + $0x74] sm:$0xf]
        %v722 = vld [vmem:[#allocation8 + $0x78] sm:$0xf]
        %v723 = vld [vmem:[#allocation8 + $0x7c] sm:$0xf]
        %v724 = vld [vmem:[#allocation8 + $0x80] sm:$0xf]
        %v725 = vld [vmem:[#allocation8 + $0x84] sm:$0xf]
        %v726 = vld [vmem:[#allocation8 + $0x88] sm:$0xf]
        %v727 = vld [vmem:[#allocation8 + $0x8c] sm:$0xf]
        %v728 = vld [vmem:[#allocation8 + $0x90] sm:$0xf]
        %v729 = vld [vmem:[#allocation8 + $0x94] sm:$0xf]
        %v730 = vld [vmem:[#allocation8 + $0x98] sm:$0xf]
        %v731 = vld [vmem:[#allocation8 + $0x9c] sm:$0xf]
        %v732 = vld [vmem:[#allocation8 + $0xa0] sm:$0xf]
        %v733 = vld [vmem:[#allocation8 + $0xa4] sm:$0xf]
        %v734 = vld [vmem:[#allocation8 + $0xa8] sm:$0xf]
        %v735 = vld [vmem:[#allocation8 + $0xac] sm:$0xf]
        %v736 = vld [vmem:[#allocation8 + $0xb0] sm:$0xf]
        %v737 = vld [vmem:[#allocation8 + $0xb4] sm:$0xf]
        %v738 = vld [vmem:[#allocation8 + $0xb8] sm:$0xf]
        %v739 = vld [vmem:[#allocation8 + $0xbc] sm:$0xf]
        %v740 = vld [vmem:[#allocation8 + $0xc0] sm:$0xf]
        %v741 = vld [vmem:[#allocation8 + $0xc4] sm:$0xf]
        %v742 = vld [vmem:[#allocation8 + $0xc8] sm:$0xf]
        %v743 = vld [vmem:[#allocation8 + $0xcc] sm:$0xf]
        %v744 = vld [vmem:[#allocation8 + $0xd0] sm:$0xf]
        %v745 = vld [vmem:[#allocation8 + $0xd4] sm:$0xf]
        %v746 = vld [vmem:[#allocation8 + $0xd8] sm:$0xf]
        %v747 = vld [vmem:[#allocation8 + $0xdc] sm:$0xf]
        %v748 = vld [vmem:[#allocation8 + $0xe0] sm:$0xf]
        %v749 = vld [vmem:[#allocation8 + $0xe4] sm:$0xf]
        %v750 = vld [vmem:[#allocation8 + $0xe8] sm:$0xf]
        %v751 = vld [vmem:[#allocation8 + $0xec] sm:$0xf]
        %v752 = vld [vmem:[#allocation8 + $0xf0] sm:$0xf]
        %v753 = vld [vmem:[#allocation8 + $0xf4] sm:$0xf]
        %v754 = vld [vmem:[#allocation8 + $0xf8] sm:$0xf]
        %v755 = vld [vmem:[#allocation8 + $0xfc] sm:$0xf]
        %v756 = vld [vmem:[#allocation8 + $0x100] sm:$0xf]
        %v757 = vld [vmem:[#allocation8 + $0x104] sm:$0xf]
        %v758 = vld [vmem:[#allocation8 + $0x108] sm:$0xf]
        %v759 = vld [vmem:[#allocation8 + $0x10c] sm:$0xf]
        %v760 = vld [vmem:[#allocation8 + $0x110] sm:$0xf]
        %v761 = vld [vmem:[#allocation8 + $0x114] sm:$0xf]
        %v762 = vld [vmem:[#allocation8 + $0x118] sm:$0xf]
        %v763 = vld [vmem:[#allocation8 + $0x11c] sm:$0xf]
        %v764 = vld [vmem:[#allocation8 + $0x120] sm:$0xf]
        %v765 = vld [vmem:[#allocation8 + $0x124] sm:$0xf]
        %v766 = vld [vmem:[#allocation8 + $0x128] sm:$0xf]
        %v767 = vld [vmem:[#allocation8 + $0x12c] sm:$0xf]
        %v768 = vld [vmem:[#allocation8 + $0x130] sm:$0xf]
        %v769 = vld [vmem:[#allocation8 + $0x134] sm:$0xf]
        %v770 = vld [vmem:[#allocation8 + $0x138] sm:$0xf]
        %v771 = vld [vmem:[#allocation8 + $0x13c] sm:$0xf]
        %v772 = vld [vmem:[#allocation8 + $0x140] sm:$0xf]
        %v773 = vld [vmem:[#allocation8 + $0x144] sm:$0xf]
        %v774 = vld [vmem:[#allocation8 + $0x148] sm:$0xf]
        %v775 = vld [vmem:[#allocation8 + $0x14c] sm:$0xf]
        %v776 = vld [vmem:[#allocation8 + $0x150] sm:$0xf]
        %v777 = vld [vmem:[#allocation8 + $0x154] sm:$0xf]
        %v778 = vld [vmem:[#allocation8 + $0x158] sm:$0xf]
        %v779 = vld [vmem:[#allocation8 + $0x15c] sm:$0xf]
        %v780 = vld [vmem:[#allocation8 + $0x160] sm:$0xf]
        %v781 = vld [vmem:[#allocation8 + $0x164] sm:$0xf]
        %v782 = vld [vmem:[#allocation8 + $0x168] sm:$0xf]
        %v783 = vld [vmem:[#allocation8 + $0x16c] sm:$0xf]
        %v784 = vld [vmem:[#allocation8 + $0x170] sm:$0xf]
        %v785 = vld [vmem:[#allocation8 + $0x174] sm:$0xf]
        %v786 = vld [vmem:[#allocation8 + $0x178] sm:$0xf]
        %v787 = vld [vmem:[#allocation8 + $0x17c] sm:$0xf]
        %v788 = vld [vmem:[#allocation8 + $0x180] sm:$0xf]
        %v789 = vld [vmem:[#allocation8 + $0x184] sm:$0xf]
        %v790 = vld [vmem:[#allocation8 + $0x188] sm:$0xf]
        %v791 = vld [vmem:[#allocation8 + $0x18c] sm:$0xf]
        %v792 = vld [vmem:[#allocation8 + $0x190] sm:$0xf]
        %v793 = vld [vmem:[#allocation8 + $0x194] sm:$0xf]
        %v794 = vld [vmem:[#allocation8 + $0x198] sm:$0xf]
        %v795 = vld [vmem:[#allocation8 + $0x19c] sm:$0xf]
        %v796 = vld [vmem:[#allocation8 + $0x1a0] sm:$0xf]
        %v797 = vld [vmem:[#allocation8 + $0x1a4] sm:$0xf]
        %v798 = vld [vmem:[#allocation8 + $0x1a8] sm:$0xf]
        %v799 = vld [vmem:[#allocation8 + $0x1ac] sm:$0xf]
        %v800 = vld [vmem:[#allocation8 + $0x1b0] sm:$0xf]
        %v801 = vld [vmem:[#allocation8 + $0x1b4] sm:$0xf]
        %v802 = vld [vmem:[#allocation8 + $0x1b8] sm:$0xf]
        %v803 = vld [vmem:[#allocation8 + $0x1bc] sm:$0xf]
        %v804 = vld [vmem:[#allocation8 + $0x1c0] sm:$0xf]
        %v805 = vld [vmem:[#allocation8 + $0x1c4] sm:$0xf]
        %v806 = vld [vmem:[#allocation8 + $0x1c8] sm:$0xf]
        %v807 = vld [vmem:[#allocation8 + $0x1cc] sm:$0xf]
        %v808 = vld [vmem:[#allocation8 + $0x1d0] sm:$0xf]
        %v809 = vld [vmem:[#allocation8 + $0x1d4] sm:$0xf]
        %v810 = vld [vmem:[#allocation8 + $0x1d8] sm:$0xf]
        %v811 = vld [vmem:[#allocation8 + $0x1dc] sm:$0xf]
        %v812 = vld [vmem:[#allocation8 + $0x1e0] sm:$0xf]
        %v813 = vld [vmem:[#allocation8 + $0x1e4] sm:$0xf]
        %v814 = vld [vmem:[#allocation8 + $0x1e8] sm:$0xf]
        %v815 = vld [vmem:[#allocation8 + $0x1ec] sm:$0xf]
        %v816 = vld [vmem:[#allocation8 + $0x1f0] sm:$0xf]
        %v817 = vld [vmem:[#allocation8 + $0x1f4] sm:$0xf]
        %v818 = vld [vmem:[#allocation8 + $0x1f8] sm:$0xf]
        %v819 = vld [vmem:[#allocation8 + $0x1fc] sm:$0xf]
        %v820 = vld [vmem:[#allocation8 + $0x200] sm:$0xf]
        %v821 = vld [vmem:[#allocation8 + $0x204] sm:$0xf]
        %v822 = vld [vmem:[#allocation8 + $0x208] sm:$0xf]
        %v823 = vld [vmem:[#allocation8 + $0x20c] sm:$0xf]
        %v824 = vld [vmem:[#allocation8 + $0x210] sm:$0xf]
        %v825 = vld [vmem:[#allocation8 + $0x214] sm:$0xf]
        %v826 = vld [vmem:[#allocation8 + $0x218] sm:$0xf]
        %v827 = vld [vmem:[#allocation8 + $0x21c] sm:$0xf]
        %v828 = vld [vmem:[#allocation8 + $0x220] sm:$0xf]
        %v829 = vld [vmem:[#allocation8 + $0x224] sm:$0xf]
        %v830 = vld [vmem:[#allocation8 + $0x228] sm:$0xf]
        %v831 = vld [vmem:[#allocation8 + $0x22c] sm:$0xf]
        %v832 = vld [vmem:[#allocation8 + $0x230] sm:$0xf]
        %v833 = vld [vmem:[#allocation8 + $0x234] sm:$0xf]
        %v834 = vld [vmem:[#allocation8 + $0x238] sm:$0xf]
        %v835 = vld [vmem:[#allocation8 + $0x23c] sm:$0xf]
        %v836 = vld [vmem:[%s4] sm:$0x1]
        %v838 = vlaneseq
        %v839 = vshrl.u32 %v838, 7
        %v840 = vsub.s32 0, %v839
        %v841 = vrot.slane %v836, %v840
        %v987 = vunpack.c.l.b16 %v692
        %v988 = vunpack.c.l.b16 %v693
        %v989 = vunpack.c.l.b16 %v694
        %v990 = vunpack.c.l.b16 %v695
        %v991 = vunpack.c.l.b16 %v696
        %v992 = vunpack.c.l.b16 %v697
        %v993 = vunpack.c.l.b16 %v698
        %v994 = vunpack.c.l.b16 %v699
        %v995 = vunpack.c.l.b16 %v700
        %v996 = vunpack.c.l.b16 %v701
        %v997 = vunpack.c.l.b16 %v702
        %v998 = vunpack.c.l.b16 %v703
        %v999 = vunpack.c.l.b16 %v704
        %v1000 = vunpack.c.l.b16 %v705
        %v1001 = vunpack.c.l.b16 %v706
        %v1002 = vunpack.c.l.b16 %v707
        %v1003 = vunpack.c.l.b16 %v708
        %v1004 = vunpack.c.l.b16 %v709
        %v1005 = vunpack.c.l.b16 %v710
        %v1006 = vunpack.c.l.b16 %v711
        %v1007 = vunpack.c.l.b16 %v712
        %v1008 = vunpack.c.l.b16 %v713
        %v1009 = vunpack.c.l.b16 %v714
        %v1010 = vunpack.c.l.b16 %v715
        %v1011 = vunpack.c.l.b16 %v716
        %v1012 = vunpack.c.l.b16 %v717
        %v1013 = vunpack.c.l.b16 %v718
        %v1014 = vunpack.c.l.b16 %v719
        %v1015 = vunpack.c.l.b16 %v720
        %v1016 = vunpack.c.l.b16 %v721
        %v1017 = vunpack.c.l.b16 %v722
        %v1018 = vunpack.c.l.b16 %v723
        %v1019 = vunpack.c.l.b16 %v724
        %v1020 = vunpack.c.l.b16 %v725
        %v1021 = vunpack.c.l.b16 %v726
        %v1022 = vunpack.c.l.b16 %v727
        %v1023 = vunpack.c.l.b16 %v728
        %v1024 = vunpack.c.l.b16 %v729
        %v1025 = vunpack.c.l.b16 %v730
        %v1026 = vunpack.c.l.b16 %v731
        %v1027 = vunpack.c.l.b16 %v732
        %v1028 = vunpack.c.l.b16 %v733
        %v1029 = vunpack.c.l.b16 %v734
        %v1030 = vunpack.c.l.b16 %v735
        %v1031 = vunpack.c.l.b16 %v736
        %v1032 = vunpack.c.l.b16 %v737
        %v1033 = vunpack.c.l.b16 %v738
        %v1034 = vunpack.c.l.b16 %v739
        %v1035 = vunpack.c.l.b16 %v740
        %v1036 = vunpack.c.l.b16 %v741
        %v1037 = vunpack.c.l.b16 %v742
        %v1038 = vunpack.c.l.b16 %v743
        %v1039 = vunpack.c.l.b16 %v744
        %v1040 = vunpack.c.l.b16 %v745
        %v1041 = vunpack.c.l.b16 %v746
        %v1042 = vunpack.c.l.b16 %v747
        %v1043 = vunpack.c.l.b16 %v748
        %v1044 = vunpack.c.l.b16 %v749
        %v1045 = vunpack.c.l.b16 %v750
        %v1046 = vunpack.c.l.b16 %v751
        %v1047 = vunpack.c.l.b16 %v752
        %v1048 = vunpack.c.l.b16 %v753
        %v1049 = vunpack.c.l.b16 %v754
        %v1050 = vunpack.c.l.b16 %v755
        %v1051 = vunpack.c.l.b16 %v756
        %v1052 = vunpack.c.l.b16 %v757
        %v1053 = vunpack.c.l.b16 %v758
        %v1054 = vunpack.c.l.b16 %v759
        %v1055 = vunpack.c.l.b16 %v760
        %v1056 = vunpack.c.l.b16 %v761
        %v1057 = vunpack.c.l.b16 %v762
        %v1058 = vunpack.c.l.b16 %v763
        %v1059 = vunpack.c.l.b16 %v764
        %v1060 = vunpack.c.l.b16 %v765
        %v1061 = vunpack.c.l.b16 %v766
        %v1062 = vunpack.c.l.b16 %v767
        %v1063 = vunpack.c.l.b16 %v768
        %v1064 = vunpack.c.l.b16 %v769
        %v1065 = vunpack.c.l.b16 %v770
        %v1066 = vunpack.c.l.b16 %v771
        %v1067 = vunpack.c.l.b16 %v772
        %v1068 = vunpack.c.l.b16 %v773
        %v1069 = vunpack.c.l.b16 %v774
        %v1070 = vunpack.c.l.b16 %v775
        %v1071 = vunpack.c.l.b16 %v776
        %v1072 = vunpack.c.l.b16 %v777
        %v1073 = vunpack.c.l.b16 %v778
        %v1074 = vunpack.c.l.b16 %v779
        %v1075 = vunpack.c.l.b16 %v780
        %v1076 = vunpack.c.l.b16 %v781
        %v1077 = vunpack.c.l.b16 %v782
        %v1078 = vunpack.c.l.b16 %v783
        %v1079 = vunpack.c.l.b16 %v784
        %v1080 = vunpack.c.l.b16 %v785
        %v1081 = vunpack.c.l.b16 %v786
        %v1082 = vunpack.c.l.b16 %v787
        %v1083 = vunpack.c.l.b16 %v788
        %v1084 = vunpack.c.l.b16 %v789
        %v1085 = vunpack.c.l.b16 %v790
        %v1086 = vunpack.c.l.b16 %v791
        %v1087 = vunpack.c.l.b16 %v792
        %v1088 = vunpack.c.l.b16 %v793
        %v1089 = vunpack.c.l.b16 %v794
        %v1090 = vunpack.c.l.b16 %v795
        %v1091 = vunpack.c.l.b16 %v796
        %v1092 = vunpack.c.l.b16 %v797
        %v1093 = vunpack.c.l.b16 %v798
        %v1094 = vunpack.c.l.b16 %v799
        %v1095 = vunpack.c.l.b16 %v800
        %v1096 = vunpack.c.l.b16 %v801
        %v1097 = vunpack.c.l.b16 %v802
        %v1098 = vunpack.c.l.b16 %v803
        %v1099 = vunpack.c.l.b16 %v804
        %v1100 = vunpack.c.l.b16 %v805
        %v1101 = vunpack.c.l.b16 %v806
        %v1102 = vunpack.c.l.b16 %v807
        %v1103 = vunpack.c.l.b16 %v808
        %v1104 = vunpack.c.l.b16 %v809
        %v1105 = vunpack.c.l.b16 %v810
        %v1106 = vunpack.c.l.b16 %v811
        %v1107 = vunpack.c.l.b16 %v812
        %v1108 = vunpack.c.l.b16 %v813
        %v1109 = vunpack.c.l.b16 %v814
        %v1110 = vunpack.c.l.b16 %v815
        %v1111 = vunpack.c.l.b16 %v816
        %v1112 = vunpack.c.l.b16 %v817
        %v1113 = vunpack.c.l.b16 %v818
        %v1114 = vunpack.c.l.b16 %v819
        %v1115 = vunpack.c.l.b16 %v820
        %v1116 = vunpack.c.l.b16 %v821
        %v1117 = vunpack.c.l.b16 %v822
        %v1118 = vunpack.c.l.b16 %v823
        %v1119 = vunpack.c.l.b16 %v824
        %v1120 = vunpack.c.l.b16 %v825
        %v1121 = vunpack.c.l.b16 %v826
        %v1122 = vunpack.c.l.b16 %v827
        %v1123 = vunpack.c.l.b16 %v828
        %v1124 = vunpack.c.l.b16 %v829
        %v1125 = vunpack.c.l.b16 %v830
        %v1126 = vunpack.c.l.b16 %v831
        %v1127 = vunpack.c.l.b16 %v832
        %v1128 = vunpack.c.l.b16 %v833
        %v1129 = vunpack.c.l.b16 %v834
        %v1130 = vunpack.c.l.b16 %v835
        %v1131 = vpack.c.b16 %v988, %v987
        %v1132 = vpack.c.b16 %v990, %v989
        %v1133 = vpack.c.b16 %v992, %v991
        %v1134 = vpack.c.b16 %v994, %v993
        %v1135 = vpack.c.b16 %v996, %v995
        %v1136 = vpack.c.b16 %v998, %v997
        %v1137 = vpack.c.b16 %v1000, %v999
        %v1138 = vpack.c.b16 %v1002, %v1001
        %v1139 = vpack.c.b16 %v1004, %v1003
        %v1140 = vpack.c.b16 %v1006, %v1005
        %v1141 = vpack.c.b16 %v1008, %v1007
        %v1142 = vpack.c.b16 %v1010, %v1009
        %v1143 = vpack.c.b16 %v1012, %v1011
        %v1144 = vpack.c.b16 %v1014, %v1013
        %v1145 = vpack.c.b16 %v1016, %v1015
        %v1146 = vpack.c.b16 %v1018, %v1017
        %v1147 = vpack.c.b16 %v1020, %v1019
        %v1148 = vpack.c.b16 %v1022, %v1021
        %v1149 = vpack.c.b16 %v1024, %v1023
        %v1150 = vpack.c.b16 %v1026, %v1025
        %v1151 = vpack.c.b16 %v1028, %v1027
        %v1152 = vpack.c.b16 %v1030, %v1029
        %v1153 = vpack.c.b16 %v1032, %v1031
        %v1154 = vpack.c.b16 %v1034, %v1033
        %v1155 = vpack.c.b16 %v1036, %v1035
        %v1156 = vpack.c.b16 %v1038, %v1037
        %v1157 = vpack.c.b16 %v1040, %v1039
        %v1158 = vpack.c.b16 %v1042, %v1041
        %v1159 = vpack.c.b16 %v1044, %v1043
        %v1160 = vpack.c.b16 %v1046, %v1045
        %v1161 = vpack.c.b16 %v1048, %v1047
        %v1162 = vpack.c.b16 %v1050, %v1049
        %v1163 = vpack.c.b16 %v1052, %v1051
        %v1164 = vpack.c.b16 %v1054, %v1053
        %v1165 = vpack.c.b16 %v1056, %v1055
        %v1166 = vpack.c.b16 %v1058, %v1057
        %v1167 = vpack.c.b16 %v1060, %v1059
        %v1168 = vpack.c.b16 %v1062, %v1061
        %v1169 = vpack.c.b16 %v1064, %v1063
        %v1170 = vpack.c.b16 %v1066, %v1065
        %v1171 = vpack.c.b16 %v1068, %v1067
        %v1172 = vpack.c.b16 %v1070, %v1069
        %v1173 = vpack.c.b16 %v1072, %v1071
        %v1174 = vpack.c.b16 %v1074, %v1073
        %v1175 = vpack.c.b16 %v1076, %v1075
        %v1176 = vpack.c.b16 %v1078, %v1077
        %v1177 = vpack.c.b16 %v1080, %v1079
        %v1178 = vpack.c.b16 %v1082, %v1081
        %v1179 = vpack.c.b16 %v1084, %v1083
        %v1180 = vpack.c.b16 %v1086, %v1085
        %v1181 = vpack.c.b16 %v1088, %v1087
        %v1182 = vpack.c.b16 %v1090, %v1089
        %v1183 = vpack.c.b16 %v1092, %v1091
        %v1184 = vpack.c.b16 %v1094, %v1093
        %v1185 = vpack.c.b16 %v1096, %v1095
        %v1186 = vpack.c.b16 %v1098, %v1097
        %v1187 = vpack.c.b16 %v1100, %v1099
        %v1188 = vpack.c.b16 %v1102, %v1101
        %v1189 = vpack.c.b16 %v1104, %v1103
        %v1190 = vpack.c.b16 %v1106, %v1105
        %v1191 = vpack.c.b16 %v1108, %v1107
        %v1192 = vpack.c.b16 %v1110, %v1109
        %v1193 = vpack.c.b16 %v1112, %v1111
        %v1194 = vpack.c.b16 %v1114, %v1113
        %v1195 = vpack.c.b16 %v1116, %v1115
        %v1196 = vpack.c.b16 %v1118, %v1117
        %v1197 = vpack.c.b16 %v1120, %v1119
        %v1198 = vpack.c.b16 %v1122, %v1121
        %v1199 = vpack.c.b16 %v1124, %v1123
        %v1200 = vpack.c.b16 %v1126, %v1125
        %v1201 = vpack.c.b16 %v1128, %v1127
        %v1202 = vpack.c.b16 %v1130, %v1129
        %1275 = vmatprep.subr.bf16.mxu0 0
        %1276 = vmatpush1.bf16.msra.mxu0 %v1131
        %1277 = vmatprep.subr.bf16.mxu0 0
        %1278 = vmatpush1.bf16.msra.mxu0 %v1132
        %1279 = vmatprep.subr.bf16.mxu0 0
        %1280 = vmatpush1.bf16.msra.mxu0 %v1133
        %1281 = vmatprep.subr.bf16.mxu0 0
        %1282 = vmatpush1.bf16.msra.mxu0 %v1134
        %1283 = vmatprep.subr.bf16.mxu0 0
        %1284 = vmatpush1.bf16.msra.mxu0 %v1135
        %1285 = vmatprep.subr.bf16.mxu0 0
        %1286 = vmatpush1.bf16.msra.mxu0 %v1136
        %1287 = vmatprep.subr.bf16.mxu0 0
        %1288 = vmatpush1.bf16.msra.mxu0 %v1137
        %1289 = vmatprep.subr.bf16.mxu0 0
        %1290 = vmatpush1.bf16.msra.mxu0 %v1138
        %1291 = vmatprep.subr.bf16.mxu0 0
        %1292 = vmatpush1.bf16.msra.mxu0 %v1139
        %1293 = vmatprep.subr.bf16.mxu0 0
        %1294 = vmatpush1.bf16.msra.mxu0 %v1140
        %1295 = vmatprep.subr.bf16.mxu0 0
        %1296 = vmatpush1.bf16.msra.mxu0 %v1141
        %1297 = vmatprep.subr.bf16.mxu0 0
        %1298 = vmatpush1.bf16.msra.mxu0 %v1142
        %1299 = vmatprep.subr.bf16.mxu0 0
        %1300 = vmatpush1.bf16.msra.mxu0 %v1143
        %1301 = vmatprep.subr.bf16.mxu0 0
        %1302 = vmatpush1.bf16.msra.mxu0 %v1144
        %1303 = vmatprep.subr.bf16.mxu0 0
        %1304 = vmatpush1.bf16.msra.mxu0 %v1145
        %1305 = vmatprep.subr.bf16.mxu0 0
        %1306 = vmatpush1.bf16.msra.mxu0 %v1146
        %1307 = vmatprep.mubr.bf16.mxu0 %v580
        %1308 = vmatmul.mubr.bf16.gmra.mrb[0].mxu0 %v564
        %v1309 = vpop.f32.mrb[0].mxu0
        %v1310 = vadd.f32 %v841, %v1309
        %v1311 = vpop.f32.mrb[0].mxu0
        %v1312 = vpop.f32.mrb[0].mxu0
        %v1313 = vpop.f32.mrb[0].mxu0
        %1314 = vdwg.mxu0
        %1315 = vmatprep.subr.bf16.mxu0 0
        %1316 = vmatpush1.bf16.msra.mxu0 %v1147
        %1317 = vmatprep.subr.bf16.mxu0 0
        %1318 = vmatpush1.bf16.msra.mxu0 %v1148
        %1319 = vmatprep.subr.bf16.mxu0 0
        %1320 = vmatpush1.bf16.msra.mxu0 %v1149
        %1321 = vmatprep.subr.bf16.mxu0 0
        %1322 = vmatpush1.bf16.msra.mxu0 %v1150
        %1323 = vmatprep.subr.bf16.mxu0 0
        %1324 = vmatpush1.bf16.msra.mxu0 %v1151
        %1325 = vmatprep.subr.bf16.mxu0 0
        %1326 = vmatpush1.bf16.msra.mxu0 %v1152
        %1327 = vmatprep.subr.bf16.mxu0 0
        %1328 = vmatpush1.bf16.msra.mxu0 %v1153
        %1329 = vmatprep.subr.bf16.mxu0 0
        %1330 = vmatpush1.bf16.msra.mxu0 %v1154
        %1331 = vmatprep.subr.bf16.mxu0 0
        %1332 = vmatpush1.bf16.msra.mxu0 %v1155
        %1333 = vmatprep.subr.bf16.mxu0 0
        %1334 = vmatpush1.bf16.msra.mxu0 %v1156
        %1335 = vmatprep.subr.bf16.mxu0 0
        %1336 = vmatpush1.bf16.msra.mxu0 %v1157
        %1337 = vmatprep.subr.bf16.mxu0 0
        %1338 = vmatpush1.bf16.msra.mxu0 %v1158
        %1339 = vmatprep.subr.bf16.mxu0 0
        %1340 = vmatpush1.bf16.msra.mxu0 %v1159
        %1341 = vmatprep.subr.bf16.mxu0 0
        %1342 = vmatpush1.bf16.msra.mxu0 %v1160
        %1343 = vmatprep.subr.bf16.mxu0 0
        %1344 = vmatpush1.bf16.msra.mxu0 %v1161
        %1345 = vmatprep.subr.bf16.mxu0 0
        %1346 = vmatpush1.bf16.msra.mxu0 %v1162
        %1347 = vmatprep.mubr.bf16.mxu0 %v611
        %1348 = vmatmul.mubr.bf16.gmra.mrb[0].mxu0 %v596
        %v1349 = vpop.f32.mrb[0].mxu0
        %v1350 = vadd.f32 %v1310, %v1349
        %v1351 = vpop.f32.mrb[0].mxu0
        %v1352 = vpop.f32.mrb[0].mxu0
        %v1353 = vpop.f32.mrb[0].mxu0
        %1354 = vdwg.mxu0
        %1355 = vmatprep.subr.bf16.mxu0 0
        %1356 = vmatpush1.bf16.msra.mxu0 %v1163
        %1357 = vmatprep.subr.bf16.mxu0 0
        %1358 = vmatpush1.bf16.msra.mxu0 %v1164
        %1359 = vmatprep.subr.bf16.mxu0 0
        %1360 = vmatpush1.bf16.msra.mxu0 %v1165
        %1361 = vmatprep.subr.bf16.mxu0 0
        %1362 = vmatpush1.bf16.msra.mxu0 %v1166
        %1363 = vmatprep.subr.bf16.mxu0 0
        %1364 = vmatpush1.bf16.msra.mxu0 %v1167
        %1365 = vmatprep.subr.bf16.mxu0 0
        %1366 = vmatpush1.bf16.msra.mxu0 %v1168
        %1367 = vmatprep.subr.bf16.mxu0 0
        %1368 = vmatpush1.bf16.msra.mxu0 %v1169
        %1369 = vmatprep.subr.bf16.mxu0 0
        %1370 = vmatpush1.bf16.msra.mxu0 %v1170
        %1371 = vmatprep.subr.bf16.mxu0 0
        %1372 = vmatpush1.bf16.msra.mxu0 %v1171
        %1373 = vmatprep.subr.bf16.mxu0 0
        %1374 = vmatpush1.bf16.msra.mxu0 %v1172
        %1375 = vmatprep.subr.bf16.mxu0 0
        %1376 = vmatpush1.bf16.msra.mxu0 %v1173
        %1377 = vmatprep.subr.bf16.mxu0 0
        %1378 = vmatpush1.bf16.msra.mxu0 %v1174
        %1379 = vmatprep.subr.bf16.mxu0 0
        %1380 = vmatpush1.bf16.msra.mxu0 %v1175
        %1381 = vmatprep.subr.bf16.mxu0 0
        %1382 = vmatpush1.bf16.msra.mxu0 %v1176
        %1383 = vmatprep.subr.bf16.mxu0 0
        %1384 = vmatpush1.bf16.msra.mxu0 %v1177
        %1385 = vmatprep.subr.bf16.mxu0 0
        %1386 = vmatpush1.bf16.msra.mxu0 %v1178
        %1387 = vmatprep.mubr.bf16.mxu0 %v643
        %1388 = vmatmul.mubr.bf16.gmra.mrb[0].mxu0 %v627
        %v1389 = vpop.f32.mrb[0].mxu0
        %v1390 = vadd.f32 %v1350, %v1389
        %v1391 = vpop.f32.mrb[0].mxu0
        %v1392 = vpop.f32.mrb[0].mxu0
        %v1393 = vpop.f32.mrb[0].mxu0
        %1394 = vdwg.mxu0
        %1395 = vmatprep.subr.bf16.mxu0 0
        %1396 = vmatpush1.bf16.msra.mxu0 %v1179
        %1397 = vmatprep.subr.bf16.mxu0 0
        %1398 = vmatpush1.bf16.msra.mxu0 %v1180
        %1399 = vmatprep.subr.bf16.mxu0 0
        %1400 = vmatpush1.bf16.msra.mxu0 %v1181
        %1401 = vmatprep.subr.bf16.mxu0 0
        %1402 = vmatpush1.bf16.msra.mxu0 %v1182
        %1403 = vmatprep.subr.bf16.mxu0 0
        %1404 = vmatpush1.bf16.msra.mxu0 %v1183
        %1405 = vmatprep.subr.bf16.mxu0 0
        %1406 = vmatpush1.bf16.msra.mxu0 %v1184
        %1407 = vmatprep.subr.bf16.mxu0 0
        %1408 = vmatpush1.bf16.msra.mxu0 %v1185
        %1409 = vmatprep.subr.bf16.mxu0 0
        %1410 = vmatpush1.bf16.msra.mxu0 %v1186
        %1411 = vmatprep.subr.bf16.mxu0 0
        %1412 = vmatpush1.bf16.msra.mxu0 %v1187
        %1413 = vmatprep.subr.bf16.mxu0 0
        %1414 = vmatpush1.bf16.msra.mxu0 %v1188
        %1415 = vmatprep.subr.bf16.mxu0 0
        %1416 = vmatpush1.bf16.msra.mxu0 %v1189
        %1417 = vmatprep.subr.bf16.mxu0 0
        %1418 = vmatpush1.bf16.msra.mxu0 %v1190
        %1419 = vmatprep.subr.bf16.mxu0 0
        %1420 = vmatpush1.bf16.msra.mxu0 %v1191
        %1421 = vmatprep.subr.bf16.mxu0 0
        %1422 = vmatpush1.bf16.msra.mxu0 %v1192
        %1423 = vmatprep.subr.bf16.mxu0 0
        %1424 = vmatpush1.bf16.msra.mxu0 %v1193
        %1425 = vmatprep.subr.bf16.mxu0 0
        %1426 = vmatpush1.bf16.msra.mxu0 %v1194
        %1427 = vmatprep.mubr.bf16.mxu0 %v675
        %1428 = vmatmul.mubr.bf16.gmra.mrb[0].mxu0 %v659
        %v1429 = vpop.f32.mrb[0].mxu0
        %v1430 = vadd.f32 %v1390, %v1429
        %v1431 = vpop.f32.mrb[0].mxu0
        %v1432 = vpop.f32.mrb[0].mxu0
        %v1433 = vpop.f32.mrb[0].mxu0
        %1434 = vdwg.mxu0
        %1435 = vmatprep.subr.bf16.mxu0 0
        %1436 = vmatpush1.bf16.msra.mxu0 %v1195
        %1437 = vmatprep.subr.bf16.mxu0 0
        %1438 = vmatpush1.bf16.msra.mxu0 %v1196
        %1439 = vmatprep.subr.bf16.mxu0 0
        %1440 = vmatpush1.bf16.msra.mxu0 %v1197
        %1441 = vmatprep.subr.bf16.mxu0 0
        %1442 = vmatpush1.bf16.msra.mxu0 %v1198
        %1443 = vmatprep.subr.bf16.mxu0 0
        %1444 = vmatpush1.bf16.msra.mxu0 %v1199
        %1445 = vmatprep.subr.bf16.mxu0 0
        %1446 = vmatpush1.bf16.msra.mxu0 %v1200
        %1447 = vmatprep.subr.bf16.mxu0 0
        %1448 = vmatpush1.bf16.msra.mxu0 %v1201
        %1449 = vmatprep.subr.bf16.mxu0 0
        %1450 = vmatpush1.bf16.msra.mxu0 %v1202
        %1451 = vmatprep.subr.bf16.mxu0 0
        %1452 = vmatpush1.bf16.msra.mxu0 0
        %1453 = vmatprep.subr.bf16.mxu0 0
        %1454 = vmatpush1.bf16.msra.mxu0 0
        %1455 = vmatprep.subr.bf16.mxu0 0
        %1456 = vmatpush1.bf16.msra.mxu0 0
        %1457 = vmatprep.subr.bf16.mxu0 0
        %1458 = vmatpush1.bf16.msra.mxu0 0
        %1459 = vmatprep.subr.bf16.mxu0 0
        %1460 = vmatpush1.bf16.msra.mxu0 0
        %1461 = vmatprep.subr.bf16.mxu0 0
        %1462 = vmatpush1.bf16.msra.mxu0 0
        %1463 = vmatprep.subr.bf16.mxu0 0
        %1464 = vmatpush1.bf16.msra.mxu0 0
        %1465 = vmatprep.subr.bf16.mxu0 0
        %1466 = vmatpush1.bf16.msra.mxu0 0
        %1467 = vmatprep.mubr.bf16.mxu0 0
        %1468 = vmatmul.mubr.bf16.gmra.mrb[0].mxu0 %v691
        %v1469 = vpop.f32.mrb[0].mxu0
        %v1470 = vadd.f32 %v1430, %v1469
        %v1471 = vpop.f32.mrb[0].mxu0
        %v1472 = vpop.f32.mrb[0].mxu0
        %v1473 = vpop.f32.mrb[0].mxu0
        %1474 = vdwg.mxu0
        %v1475 = vmax.f32 %v1470, 0.0
        %v1476 = vpack.c.bf16 %v1475, %v1475
        %v1477 = vld [vmem:[#allocation9] sm:$0xf]
        %v1478 = vld [vmem:[#allocation9 + $0x4] sm:$0xf]
        %v1479 = vld [vmem:[#allocation9 + $0x8] sm:$0xf]
        %v1480 = vld [vmem:[#allocation9 + $0xc] sm:$0xf]
        %v1481 = vld [vmem:[#allocation9 + $0x10] sm:$0xf]
        %v1482 = vld [vmem:[#allocation9 + $0x14] sm:$0xf]
        %v1483 = vld [vmem:[#allocation9 + $0x18] sm:$0xf]
        %v1484 = vld [vmem:[#allocation9 + $0x1c] sm:$0xf]
        %v1485 = vld [vmem:[#allocation9 + $0x20] sm:$0xf]
        %v1486 = vld [vmem:[#allocation9 + $0x24] sm:$0xf]
        %v1487 = vld [vmem:[#allocation9 + $0x28] sm:$0xf]
        %v1488 = vld [vmem:[#allocation9 + $0x2c] sm:$0xf]
        %v1489 = vld [vmem:[#allocation9 + $0x30] sm:$0xf]
        %v1490 = vld [vmem:[#allocation9 + $0x34] sm:$0xf]
        %v1491 = vld [vmem:[#allocation9 + $0x38] sm:$0xf]
        %v1492 = vld [vmem:[#allocation9 + $0x3c] sm:$0xf]
        %v1509 = vunpack.c.l.b16 %v1477
        %v1510 = vunpack.c.l.b16 %v1478
        %v1511 = vunpack.c.l.b16 %v1479
        %v1512 = vunpack.c.l.b16 %v1480
        %v1513 = vunpack.c.l.b16 %v1481
        %v1514 = vunpack.c.l.b16 %v1482
        %v1515 = vunpack.c.l.b16 %v1483
        %v1516 = vunpack.c.l.b16 %v1484
        %v1517 = vunpack.c.l.b16 %v1485
        %v1518 = vunpack.c.l.b16 %v1486
        %v1519 = vunpack.c.l.b16 %v1487
        %v1520 = vunpack.c.l.b16 %v1488
        %v1521 = vunpack.c.l.b16 %v1489
        %v1522 = vunpack.c.l.b16 %v1490
        %v1523 = vunpack.c.l.b16 %v1491
        %v1524 = vunpack.c.l.b16 %v1492
        %v1525 = vpack.c.b16 %v1510, %v1509
        %v1526 = vpack.c.b16 %v1512, %v1511
        %v1527 = vpack.c.b16 %v1514, %v1513
        %v1528 = vpack.c.b16 %v1516, %v1515
        %v1529 = vpack.c.b16 %v1518, %v1517
        %v1530 = vpack.c.b16 %v1520, %v1519
        %v1531 = vpack.c.b16 %v1522, %v1521
        %v1532 = vpack.c.b16 %v1524, %v1523
        %1541 = vmatprep.subr.bf16.mxu0 0
        %1542 = vmatpush1.bf16.msra.mxu0 %v1525
        %1543 = vmatprep.subr.bf16.mxu0 0
        %1544 = vmatpush1.bf16.msra.mxu0 %v1526
        %1545 = vmatprep.subr.bf16.mxu0 0
        %1546 = vmatpush1.bf16.msra.mxu0 %v1527
        %1547 = vmatprep.subr.bf16.mxu0 0
        %1548 = vmatpush1.bf16.msra.mxu0 %v1528
        %1549 = vmatprep.subr.bf16.mxu0 0
        %1550 = vmatpush1.bf16.msra.mxu0 %v1529
        %1551 = vmatprep.subr.bf16.mxu0 0
        %1552 = vmatpush1.bf16.msra.mxu0 %v1530
        %1553 = vmatprep.subr.bf16.mxu0 0
        %1554 = vmatpush1.bf16.msra.mxu0 %v1531
        %1555 = vmatprep.subr.bf16.mxu0 0
        %1556 = vmatpush1.bf16.msra.mxu0 %v1532
        %1557 = vmatprep.subr.bf16.mxu0 0
        %1558 = vmatpush1.bf16.msra.mxu0 0
        %1559 = vmatprep.subr.bf16.mxu0 0
        %1560 = vmatpush1.bf16.msra.mxu0 0
        %1561 = vmatprep.subr.bf16.mxu0 0
        %1562 = vmatpush1.bf16.msra.mxu0 0
        %1563 = vmatprep.subr.bf16.mxu0 0
        %1564 = vmatpush1.bf16.msra.mxu0 0
        %1565 = vmatprep.subr.bf16.mxu0 0
        %1566 = vmatpush1.bf16.msra.mxu0 0
        %1567 = vmatprep.subr.bf16.mxu0 0
        %1568 = vmatpush1.bf16.msra.mxu0 0
        %1569 = vmatprep.subr.bf16.mxu0 0
        %1570 = vmatpush1.bf16.msra.mxu0 0
        %1571 = vmatprep.subr.bf16.mxu0 0
        %1572 = vmatpush1.bf16.msra.mxu0 0
        %1573 = vmatprep.mubr.bf16.mxu0 0
        %1574 = vmatmul.mubr.bf16.gmra.mrb[0].mxu0 %v1476
        %v1575 = vpop.f32.mrb[0].mxu0
        %v1576 = vadd.f32 0.0, %v1575
        %v1577 = vpop.f32.mrb[0].mxu0
        %v1578 = vpop.f32.mrb[0].mxu0
        %v1579 = vpop.f32.mrb[0].mxu0
        %1580 = vdwg.mxu0
        %vm1581 = vcmask 1043456
        %v1582 = vsel %vm1581, %v1576, 0.0
        %v1583 = vrot.slane %v1582, 4
        %v1584 = vadd.f32 %v1582, %v1583
        %v1585 = vrot.slane %v1584, 2
        %v1586 = vadd.f32 %v1584, %v1585
        %v1587 = vrot.slane %v1586, 1
        %v1588 = vadd.f32 %v1586, %v1587
        %v1589 = vrcp.pop 4.0
        %v1590 = vmul.f32 %v1588, %v1589
        %v1591 = vld [vmem:[%s6] sm:$0x1]
        %v1592 = vadd.f32 %v1590, %v1591
        %1593 = vst [vmem:[%s340] sm:$0x1] %v1592
        %s1594 = sand.u32 %s186, 1
        %s1595 = scalar_lea.sflag [#allocation5], %s1594
        %s1596 = sand.u32 %s186, 1
        %s1597 = scalar_lea.vmem [#allocation11], %s1596
        // Predicated region
        $region65: #{tpu_custom_call.1} parent=47 // pred_check
          %p1598 = pneg %p196
        $region66: #{tpu_custom_call.1} parent=47 // pred_check_branch
          %1600 = sbr.rel (%p1598) target = $region68
        $region67: #{tpu_custom_call.1} parent=47 // pred_region
          %s1602 = ssub.s32 16, 16
          %1603 = vsyncadd %s1595, %s1602
          %s1604 = smul.addr %s26, 16
          %s1605 = scalar_lea.hbm %s7, %s1604
          %s1607 = sshll.u32 %s1597, 4
          %s1608 = int_to_ptr.vmem [resolvable:$true] %s1607
          %1610 = dma.vmem_to_hbm [thread:$0]  %s1608, 16, %s1605, %s1595
        $region68: #{tpu_custom_call.1} parent=47 // pred_fallthru
          _
      $region48: #{tpu_custom_call.1} parent=5 // pred_fallthru
        _
      %p1611 = scmp.le.s32.totalorder 2, %s21
      // Predicated region
      $region69: #{tpu_custom_call.1} parent=5 // pred_check
        %p1612 = pneg %p1611
      $region70: #{tpu_custom_call.1} parent=5 // pred_check_branch
        %1614 = sbr.rel (%p1612) target = $region72
      $region71: #{tpu_custom_call.1} parent=5 // pred_region
        %s1615 = ssub.s32 %s21, 2
        // Predicated region
        $region73: #{tpu_custom_call.1} parent=71 // pred_check
          %p1616 = pneg %p202
        $region74: #{tpu_custom_call.1} parent=71 // pred_check_branch
          %1618 = sbr.rel (%p1616) target = $region76
        $region75: #{tpu_custom_call.1} parent=71 // pred_region
          %s1619 = sand.u32 %s187, 1
          %s1620 = scalar_lea.sflag [#allocation5], %s1619
          %s1621 = sand.u32 %s187, 1
          %s1622 = scalar_lea.vmem [#allocation11], %s1621
          %1623 = dma.done %s1620, 16
        $region76: #{tpu_custom_call.1} parent=71 // pred_fallthru
          _
      $region72: #{tpu_custom_call.1} parent=5 // pred_fallthru
        _
    $region6: #{tpu_custom_call.1} parent=1 // loop_footer
      %s25 = sadd.s32 1, %s21
    $region7: #{tpu_custom_call.1} parent=1 // loop_footer_branch
      %20 = sbr.rel target = $region3
    $region8: #{tpu_custom_call.1} parent=1 // loop_exit
      _
    %1624 = vsyncpa [#allocation4], 1
    %s1625 = scalar_lea.sflag [#allocation4], 1
    %1626 = vsyncpa %s1625, 1
    %1627 = vsyncpa [#allocation7], 1
    %1628 = vsyncpa [#allocation10], 1
    %1629 = vsyncpa [#allocation5], 1
    %s1630 = scalar_lea.sflag [#allocation5], 1
    %1631 = vsyncpa %s1630, 1

</llo_original>
